<compile_context>
chip_gen: v5e
topology: v5e:2x2
jax: 0.10.0
libtpu: 0.0.40
codegen_flags: <defaults>
</compile_context>

<pallas_src>
import functools
import math

import jax
import jax.numpy as jnp
from jax.experimental import pallas as pl
from jax.experimental.pallas import tpu as pltpu


def _attention_kernel(node_q_ref, node_kv_ref, edge_ref,
                      wq_ref, bq_ref, wkv_ref, bkv_ref,
                      we_ref, be_ref, woe_ref, boe_ref, won_ref, bon_ref,
                      node_out_ref, edge_out_ref,
                      *, tm, n_p, c, pack, inv_sqrt_dk):
    cp = pack * c
    bf16 = jnp.bfloat16
    f32 = jnp.float32

    # ---- projections (bf16 MXU operands, f32 accumulate) -------------------
    # q for this row tile; the weight is lane-tiled `pack` times so q comes out
    # already replicated across the packed key groups: (tm, cp).  The
    # 1/sqrt(d_k) scale is folded here (tm*cp elements) instead of being a
    # full pass over the (tm, n_p, cp) attention tile.
    node_q = node_q_ref[0].astype(bf16)                      # (tm, c)
    q_rep = (jnp.dot(node_q, wq_ref[...],
                     preferred_element_type=f32) + bq_ref[...]) * inv_sqrt_dk

    # k and v for all rows at once, in packed (n_p, cp) layout via a fused
    # block-diagonal weight (one MXU weight push for both).
    node_kv = node_kv_ref[0].astype(bf16)                    # (n_p, cp)
    kv = jnp.dot(node_kv, wkv_ref[...],
                 preferred_element_type=f32) + bkv_ref[...]  # (n_p, 2*cp)
    k_p = kv[:, :cp]
    v_p = kv[:, cp:]

    # edge projection e[i, j, ch] -- operand is already 2-D lane-dense; the
    # bf16 cast happens only here (HBM read stays in the caller's dtype).
    edge_flat = edge_ref[0].astype(bf16)                     # (tm*n_p, cp)
    e_flat = jnp.dot(edge_flat, we_ref[...],
                     preferred_element_type=f32) + be_ref[...]

    # ---- attention scores (f32 elementwise) --------------------------------
    e3 = e_flat.reshape(tm, n_p, cp)                         # 8-aligned split
    attn3 = (q_rep[:, None, :] * k_p[None, :, :]) * (e3 + 1.0) * e3

    # ---- edge output: out_e applied to the pre-softmax attn ----------------
    edge_out = jnp.dot(attn3.reshape(tm * n_p, cp).astype(bf16),
                       woe_ref[...],
                       preferred_element_type=f32) + boe_ref[...]
    edge_out_ref[0] = edge_out.astype(edge_out_ref.dtype)

    # ---- softmax over the key axis (sublane axis j + `pack` lane groups) ---
    m_part = jnp.max(attn3, axis=1)                          # (tm, cp)
    m = m_part[:, 0:c]
    for g in range(1, pack):
        m = jnp.maximum(m, m_part[:, g * c:(g + 1) * c])     # (tm, c)
    m_rep = m if pack == 1 else jnp.concatenate([m] * pack, axis=-1)

    p3 = jnp.exp(attn3 - m_rep[:, None, :])                  # (tm, n_p, cp)
    s_part = jnp.sum(p3, axis=1)                             # (tm, cp)
    agg_part = jnp.sum(p3 * v_p[None, :, :], axis=1)         # (tm, cp)

    s = s_part[:, 0:c]
    agg = agg_part[:, 0:c]
    for g in range(1, pack):
        s = s + s_part[:, g * c:(g + 1) * c]
        agg = agg + agg_part[:, g * c:(g + 1) * c]

    # Deferred normalization: one small EUP reciprocal instead of an N^2*C
    # divide pass over the big tensor.
    agg = agg * pl.reciprocal(s, approx=True)                # (tm, c)

    node_out = jnp.dot(agg.astype(bf16), won_ref[...],
                       preferred_element_type=f32) + bon_ref[...]
    node_out_ref[0] = node_out.astype(node_out_ref.dtype)


def _pick_tm(n, c, budget_bytes, edge_itemsize):
    # per-step VMEM ~ tm*n*c * (2*edge_in (double-buffered) + 2*bf16 out
    # (double-buffered) + ~4 f32 intermediates of the attention tile)
    per_elem = 2 * edge_itemsize + 4 + 16
    cap = max(8, budget_bytes // (per_elem * n * c))
    tm = min(n, int(cap))
    tm = max(8, (tm // 8) * 8)
    while n % tm:
        tm -= 8
    return tm


def attention_new_pallas(node, edge, params, heads, *, tm=None,
                         vmem_budget_bytes=24 * 1024 * 1024):
    b, n, c = node.shape
    assert edge.shape == (b, n, n, c)
    assert c % heads == 0
    d_k = c // heads
    f32, bf16 = jnp.float32, jnp.bfloat16

    # Lane-packing factor: fold `pack` consecutive key positions into the lane
    # dim when C < 128 so VPU / MXU / stores run lane-dense.
    pack = 1
    if c < 128 and 128 % c == 0:
        pack = 128 // c
        while pack > 1 and (n % pack != 0 or (n // pack) % 8 != 0):
            pack //= 2
    n_p = n // pack
    cp = pack * c
    # TODO(synk): pad N up to a multiple of 8 to support ragged node counts.
    assert n_p % 8 == 0, "N (or N/pack) must be a multiple of 8"

    edge_itemsize = jnp.dtype(edge.dtype).itemsize
    if tm is None:
        tm = _pick_tm(n, c, vmem_budget_bytes, edge_itemsize)
    assert n % tm == 0 and tm % 8 == 0, "tm must be a multiple of 8 dividing N"
    grid = (b, n // tm)

    def wt(w):      # torch (out, in) -> (in, out)
        return jnp.transpose(w)

    def bdiag(w_t):  # (c, c) -> (cp, cp) block-diagonal (one block per packed key)
        return w_t if pack == 1 else jnp.kron(jnp.eye(pack, dtype=w_t.dtype), w_t)

    def brep(bias):  # (c,) -> (1, cp), replicated per packed key
        return jnp.tile(bias, pack).reshape(1, cp)

    # Weights as bf16 MXU operands; biases stay f32 (added to f32 accumulators).
    wq_rep = jnp.tile(wt(params["wq"]), (1, pack)).astype(bf16)          # (c, cp)
    bq_rep = brep(params["bq"]).astype(f32)
    wkv_bd = jnp.concatenate([bdiag(wt(params["wk"])),
                              bdiag(wt(params["wv"]))], axis=1).astype(bf16)  # (cp, 2cp)
    bkv_rep = jnp.concatenate([brep(params["bk"]), brep(params["bv"])],
                              axis=1).astype(f32)                        # (1, 2cp)
    we_bd = bdiag(wt(params["we"])).astype(bf16)                         # (cp, cp)
    be_rep = brep(params["be"]).astype(f32)
    woe_bd = bdiag(wt(params["woe"])).astype(bf16)                       # (cp, cp)
    boe_rep = brep(params["boe"]).astype(f32)
    won_t = wt(params["won"]).astype(bf16)                               # (c, c)
    bon_2d = params["bon"].reshape(1, c).astype(f32)

    # The big edge tensor streams into the kernel in its original dtype
    # (metadata-only reshape, no convert pass); the kernel casts the MXU
    # operand to bf16.  The edge output is written back in bf16.
    edge_p = edge.reshape(b, n * n_p, cp)
    node_kv_p = node.reshape(b, n_p, cp)

    kernel = functools.partial(_attention_kernel, tm=tm, n_p=n_p, c=c,
                               pack=pack, inv_sqrt_dk=1.0 / math.sqrt(d_k))

    def const_spec(shape):
        return pl.BlockSpec(shape, lambda bi, ii, _r=len(shape): (0,) * _r)

    in_specs = [
        pl.BlockSpec((1, tm, c), lambda bi, ii: (bi, ii, 0)),          # node (q rows)
        pl.BlockSpec((1, n_p, cp), lambda bi, ii: (bi, 0, 0)),         # node packed (k/v), resident
        pl.BlockSpec((1, tm * n_p, cp), lambda bi, ii: (bi, ii, 0)),   # edge tile
        const_spec((c, cp)), const_spec((1, cp)),                      # q
        const_spec((cp, 2 * cp)), const_spec((1, 2 * cp)),             # k|v fused
        const_spec((cp, cp)), const_spec((1, cp)),                     # e
        const_spec((cp, cp)), const_spec((1, cp)),                     # out_e
        const_spec((c, c)), const_spec((1, c)),                        # out_n
    ]
    out_specs = [
        pl.BlockSpec((1, tm, c), lambda bi, ii: (bi, ii, 0)),          # node out (f32)
        pl.BlockSpec((1, tm * n_p, cp), lambda bi, ii: (bi, ii, 0)),   # edge out (bf16)
    ]
    out_shape = [
        jax.ShapeDtypeStruct((b, n, c), node.dtype),
        jax.ShapeDtypeStruct((b, n * n_p, cp), bf16),
    ]

    per_elem = 2 * edge_itemsize + 4 + 16
    vmem_limit = int(min(48 << 20,
                         max(32 << 20, per_elem * tm * n * c + (4 << 20))))

    node_out, edge_out = pl.pallas_call(
        kernel,
        grid=grid,
        in_specs=in_specs,
        out_specs=out_specs,
        out_shape=out_shape,
        compiler_params=pltpu.CompilerParams(
            dimension_semantics=("parallel", "parallel"),
            vmem_limit_bytes=vmem_limit),
    )(node, node_kv_p, edge_p,
      wq_rep, bq_rep, wkv_bd, bkv_rep, we_bd, be_rep,
      woe_bd, boe_rep, won_t, bon_2d)

    return node_out, edge_out.reshape(b, n, n, c)


def attention_new_ref(node, edge, params, heads):
    """Pure-JAX reference mirroring the PyTorch forward (channel-flattened)."""
    b, n, c = node.shape
    d_k = c // heads

    def lin(x, w, bias):
        return jnp.einsum("...i,oi->...o", x, w) + bias

    q = lin(node, params["wq"], params["bq"])
    k = lin(node, params["wk"], params["bk"])
    v = lin(node, params["wv"], params["bv"])
    e = lin(edge, params["we"], params["be"])

    attn = q[:, :, None, :] * k[:, None, :, :]
    attn = attn / math.sqrt(d_k)
    attn = attn * (e + 1.0) * e
    edge_out = lin(attn, params["woe"], params["boe"])
    p = jax.nn.softmax(attn, axis=2)
    agg = jnp.sum(p * v[:, None, :, :], axis=2)
    node_out = lin(agg, params["won"], params["bon"])
    return node_out, edge_out


def init_params(key, dim):
    """nn.Linear default init: U(-1/sqrt(in), 1/sqrt(in))."""
    bound = 1.0 / math.sqrt(dim)
    names = ["q", "k", "v", "e", "oe", "on"]
    params = {}
    keys = jax.random.split(key, 2 * len(names))
    for idx, nm in enumerate(names):
        params["w" + nm] = jax.random.uniform(
            keys[2 * idx], (dim, dim), jnp.float32, -bound, bound)
        params["b" + nm] = jax.random.uniform(
            keys[2 * idx + 1], (dim,), jnp.float32, -bound, bound)
    return params


if __name__ == "__main__":
    B, N, C, HEADS = 2, 32, 32, 4

    key = jax.random.PRNGKey(0)
    k_node, k_edge, k_param = jax.random.split(key, 3)
    node = jax.random.normal(k_node, (B, N, C), jnp.float32)
    edge = jax.random.normal(k_edge, (B, N, N, C), jnp.float32)
    params = init_params(k_param, C)

    # tm=8 -> grid (2, 4): exercises the row-tiled pipeline.
    node_out, edge_out = attention_new_pallas(node, edge, params, HEADS, tm=8)
    node_out = jax.block_until_ready(node_out)
    edge_out = jax.block_until_ready(edge_out)

    # Reference computed at the kernel's MXU precision (bf16-rounded
    # inputs/weights); remaining delta is the kernel's internal bf16 rounding.
    def rb(x):
        return x.astype(jnp.bfloat16).astype(jnp.float32)

    params_r = {nm: (rb(v) if nm.startswith("w") else v) for nm, v in params.items()}
    node_ref, edge_ref = attention_new_ref(rb(node), rb(edge), params_r, HEADS)

    node_f32 = node_out.astype(jnp.float32)
    edge_f32 = edge_out.astype(jnp.float32)
    n_err = float(jnp.max(jnp.abs(node_f32 - node_ref)))
    e_err = float(jnp.max(jnp.abs(edge_f32 - edge_ref)))
    ok_n = bool(jnp.allclose(node_f32, node_ref, atol=5e-2, rtol=5e-2))
    ok_e = bool(jnp.allclose(edge_f32, edge_ref, atol=5e-2, rtol=5e-2))
    assert ok_n and ok_e, f"mismatch: node max err {n_err}, edge max err {e_err}"

    print("KERNEL_OK")
</pallas_src>

<mosaic_0001>
module attributes {stable_mosaic.version = 11 : i64} {
  func.func @_attention_kernel(%arg0: i32, %arg1: i32, %arg2: memref<1x8x32xf32, #tpu.memory_space<vmem>>, %arg3: memref<1x8x128xf32, #tpu.memory_space<vmem>>, %arg4: memref<1x64x128xf32, #tpu.memory_space<vmem>>, %arg5: memref<32x128xbf16, #tpu.memory_space<vmem>>, %arg6: memref<1x128xf32, #tpu.memory_space<vmem>>, %arg7: memref<128x256xbf16, #tpu.memory_space<vmem>>, %arg8: memref<1x256xf32, #tpu.memory_space<vmem>>, %arg9: memref<128x128xbf16, #tpu.memory_space<vmem>>, %arg10: memref<1x128xf32, #tpu.memory_space<vmem>>, %arg11: memref<128x128xbf16, #tpu.memory_space<vmem>>, %arg12: memref<1x128xf32, #tpu.memory_space<vmem>>, %arg13: memref<32x32xbf16, #tpu.memory_space<vmem>>, %arg14: memref<1x32xf32, #tpu.memory_space<vmem>>, %arg15: memref<1x8x32xf32, #tpu.memory_space<vmem>>, %arg16: memref<1x64x128xbf16, #tpu.memory_space<vmem>>) attributes {dimension_semantics = [#tpu.dimension_semantics<parallel>, #tpu.dimension_semantics<parallel>], iteration_bounds = array<i64: 2, 4>, scalar_prefetch = 0 : i64, scratch_operands = 0 : i64, tpu.core_type = #tpu.core_type<tc>, window_params = [{transform_indices = @transform_0, window_bounds = array<i64: 1, 8, 32>}, {transform_indices = @transform_1, window_bounds = array<i64: 1, 8, 128>}, {transform_indices = @transform_2, window_bounds = array<i64: 1, 64, 128>}, {pipeline_mode = #tpu.pipeline_mode<synchronous>, transform_indices = @transform_3, window_bounds = array<i64: 32, 128>}, {pipeline_mode = #tpu.pipeline_mode<synchronous>, transform_indices = @transform_4, window_bounds = array<i64: 1, 128>}, {pipeline_mode = #tpu.pipeline_mode<synchronous>, transform_indices = @transform_5, window_bounds = array<i64: 128, 256>}, {pipeline_mode = #tpu.pipeline_mode<synchronous>, transform_indices = @transform_6, window_bounds = array<i64: 1, 256>}, {pipeline_mode = #tpu.pipeline_mode<synchronous>, transform_indices = @transform_7, window_bounds = array<i64: 128, 128>}, {pipeline_mode = #tpu.pipeline_mode<synchronous>, transform_indices = @transform_8, window_bounds = array<i64: 1, 128>}, {pipeline_mode = #tpu.pipeline_mode<synchronous>, transform_indices = @transform_9, window_bounds = array<i64: 128, 128>}, {pipeline_mode = #tpu.pipeline_mode<synchronous>, transform_indices = @transform_10, window_bounds = array<i64: 1, 128>}, {pipeline_mode = #tpu.pipeline_mode<synchronous>, transform_indices = @transform_11, window_bounds = array<i64: 32, 32>}, {pipeline_mode = #tpu.pipeline_mode<synchronous>, transform_indices = @transform_12, window_bounds = array<i64: 1, 32>}, {transform_indices = @transform_13, window_bounds = array<i64: 1, 8, 32>}, {transform_indices = @transform_14, window_bounds = array<i64: 1, 64, 128>}]} {
    %c0 = arith.constant 0 : index
    %c0_0 = arith.constant 0 : index
    %c0_1 = arith.constant 0 : index
    %0 = vector.load %arg2[%c0, %c0_0, %c0_1] : memref<1x8x32xf32, #tpu.memory_space<vmem>>, vector<1x8x32xf32>
    %1 = vector.shape_cast %0 : vector<1x8x32xf32> to vector<8x32xf32>
    %2 = arith.truncf %1 : vector<8x32xf32> to vector<8x32xbf16>
    %c0_2 = arith.constant 0 : index
    %c0_3 = arith.constant 0 : index
    %3 = vector.load %arg5[%c0_2, %c0_3] : memref<32x128xbf16, #tpu.memory_space<vmem>>, vector<32x128xbf16>
    %cst = arith.constant dense<0.000000e+00> : vector<8x128xf32>
    %4 = tpu.matmul %2, %3, %cst {dimension_numbers = #tpu.dot_dimension_numbers<[1], [0], [0], [1], [0, 0, 1, 1], [], []>} : vector<8x32xbf16>, vector<32x128xbf16>, vector<8x128xf32> -> vector<8x128xf32>
    %c0_4 = arith.constant 0 : index
    %c0_5 = arith.constant 0 : index
    %5 = vector.load %arg6[%c0_4, %c0_5] : memref<1x128xf32, #tpu.memory_space<vmem>>, vector<1x128xf32>
    %6 = vector.broadcast %5 : vector<1x128xf32> to vector<8x128xf32>
    %7 = arith.addf %4, %6 : vector<8x128xf32>
    %cst_6 = arith.constant 0.353553385 : f32
    %8 = vector.broadcast %cst_6 : f32 to vector<8x128xf32>
    %9 = arith.mulf %7, %8 : vector<8x128xf32>
    %c0_7 = arith.constant 0 : index
    %c0_8 = arith.constant 0 : index
    %c0_9 = arith.constant 0 : index
    %10 = vector.load %arg3[%c0_7, %c0_8, %c0_9] : memref<1x8x128xf32, #tpu.memory_space<vmem>>, vector<1x8x128xf32>
    %11 = vector.shape_cast %10 : vector<1x8x128xf32> to vector<8x128xf32>
    %12 = arith.truncf %11 : vector<8x128xf32> to vector<8x128xbf16>
    %c0_10 = arith.constant 0 : index
    %c0_11 = arith.constant 0 : index
    %13 = vector.load %arg7[%c0_10, %c0_11] : memref<128x256xbf16, #tpu.memory_space<vmem>>, vector<128x256xbf16>
    %cst_12 = arith.constant dense<0.000000e+00> : vector<8x256xf32>
    %14 = tpu.matmul %12, %13, %cst_12 {dimension_numbers = #tpu.dot_dimension_numbers<[1], [0], [0], [1], [0, 0, 1, 1], [], []>} : vector<8x128xbf16>, vector<128x256xbf16>, vector<8x256xf32> -> vector<8x256xf32>
    %c0_13 = arith.constant 0 : index
    %c0_14 = arith.constant 0 : index
    %15 = vector.load %arg8[%c0_13, %c0_14] : memref<1x256xf32, #tpu.memory_space<vmem>>, vector<1x256xf32>
    %16 = vector.broadcast %15 : vector<1x256xf32> to vector<8x256xf32>
    %17 = arith.addf %14, %16 : vector<8x256xf32>
    %18 = vector.extract_strided_slice %17 {offsets = [0, 0], sizes = [8, 128], strides = [1, 1]} : vector<8x256xf32> to vector<8x128xf32>
    %19 = vector.extract_strided_slice %17 {offsets = [0, 128], sizes = [8, 128], strides = [1, 1]} : vector<8x256xf32> to vector<8x128xf32>
    %c0_15 = arith.constant 0 : index
    %c0_16 = arith.constant 0 : index
    %c0_17 = arith.constant 0 : index
    %20 = vector.load %arg4[%c0_15, %c0_16, %c0_17] : memref<1x64x128xf32, #tpu.memory_space<vmem>>, vector<1x64x128xf32>
    %21 = vector.shape_cast %20 : vector<1x64x128xf32> to vector<64x128xf32>
    %22 = arith.truncf %21 : vector<64x128xf32> to vector<64x128xbf16>
    %c0_18 = arith.constant 0 : index
    %c0_19 = arith.constant 0 : index
    %23 = vector.load %arg9[%c0_18, %c0_19] : memref<128x128xbf16, #tpu.memory_space<vmem>>, vector<128x128xbf16>
    %cst_20 = arith.constant dense<0.000000e+00> : vector<64x128xf32>
    %24 = tpu.matmul %22, %23, %cst_20 {dimension_numbers = #tpu.dot_dimension_numbers<[1], [0], [0], [1], [0, 0, 1, 1], [], []>} : vector<64x128xbf16>, vector<128x128xbf16>, vector<64x128xf32> -> vector<64x128xf32>
    %c0_21 = arith.constant 0 : index
    %c0_22 = arith.constant 0 : index
    %25 = vector.load %arg10[%c0_21, %c0_22] : memref<1x128xf32, #tpu.memory_space<vmem>>, vector<1x128xf32>
    %26 = vector.broadcast %25 : vector<1x128xf32> to vector<64x128xf32>
    %27 = arith.addf %24, %26 : vector<64x128xf32>
    %28 = vector.shape_cast %27 : vector<64x128xf32> to vector<8x8x128xf32>
    %29 = vector.shape_cast %9 : vector<8x128xf32> to vector<8x1x128xf32>
    %30 = vector.shape_cast %18 : vector<8x128xf32> to vector<1x8x128xf32>
    %31 = vector.broadcast %29 : vector<8x1x128xf32> to vector<8x8x128xf32>
    %32 = vector.broadcast %30 : vector<1x8x128xf32> to vector<8x8x128xf32>
    %33 = arith.mulf %31, %32 : vector<8x8x128xf32>
    %cst_23 = arith.constant 1.000000e+00 : f32
    %34 = vector.broadcast %cst_23 : f32 to vector<8x8x128xf32>
    %35 = arith.addf %28, %34 : vector<8x8x128xf32>
    %36 = arith.mulf %33, %35 : vector<8x8x128xf32>
    %37 = arith.mulf %36, %28 : vector<8x8x128xf32>
    %38 = vector.shape_cast %37 : vector<8x8x128xf32> to vector<64x128xf32>
    %39 = arith.truncf %38 : vector<64x128xf32> to vector<64x128xbf16>
    %c0_24 = arith.constant 0 : index
    %c0_25 = arith.constant 0 : index
    %40 = vector.load %arg11[%c0_24, %c0_25] : memref<128x128xbf16, #tpu.memory_space<vmem>>, vector<128x128xbf16>
    %cst_26 = arith.constant dense<0.000000e+00> : vector<64x128xf32>
    %41 = tpu.matmul %39, %40, %cst_26 {dimension_numbers = #tpu.dot_dimension_numbers<[1], [0], [0], [1], [0, 0, 1, 1], [], []>} : vector<64x128xbf16>, vector<128x128xbf16>, vector<64x128xf32> -> vector<64x128xf32>
    %c0_27 = arith.constant 0 : index
    %c0_28 = arith.constant 0 : index
    %42 = vector.load %arg12[%c0_27, %c0_28] : memref<1x128xf32, #tpu.memory_space<vmem>>, vector<1x128xf32>
    %43 = vector.broadcast %42 : vector<1x128xf32> to vector<64x128xf32>
    %44 = arith.addf %41, %43 : vector<64x128xf32>
    %45 = arith.truncf %44 : vector<64x128xf32> to vector<64x128xbf16>
    %c0_29 = arith.constant 0 : index
    %c0_30 = arith.constant 0 : index
    %c0_31 = arith.constant 0 : index
    %46 = vector.load %arg16[%c0_29, %c0_30, %c0_31] : memref<1x64x128xbf16, #tpu.memory_space<vmem>>, vector<1x64x128xbf16>
    %47 = vector.shape_cast %46 : vector<1x64x128xbf16> to vector<64x128xbf16>
    %48 = vector.shape_cast %45 : vector<64x128xbf16> to vector<1x64x128xbf16>
    tpu.vector_store %arg16[%c0_29, %c0_30, %c0_31], %48 {strides = array<i32>} : memref<1x64x128xbf16, #tpu.memory_space<vmem>>, vector<1x64x128xbf16>,
    %cst_32 = arith.constant dense<0xFF800000> : vector<8x128xf32>
    %49 = vector.multi_reduction <maximumf>, %37, %cst_32 [1] : vector<8x8x128xf32> to vector<8x128xf32>
    %50 = vector.extract_strided_slice %49 {offsets = [0, 0], sizes = [8, 32], strides = [1, 1]} : vector<8x128xf32> to vector<8x32xf32>
    %51 = vector.extract_strided_slice %49 {offsets = [0, 32], sizes = [8, 32], strides = [1, 1]} : vector<8x128xf32> to vector<8x32xf32>
    %52 = arith.maximumf %50, %51 : vector<8x32xf32>
    %53 = vector.extract_strided_slice %49 {offsets = [0, 64], sizes = [8, 32], strides = [1, 1]} : vector<8x128xf32> to vector<8x32xf32>
    %54 = arith.maximumf %52, %53 : vector<8x32xf32>
    %55 = vector.extract_strided_slice %49 {offsets = [0, 96], sizes = [8, 32], strides = [1, 1]} : vector<8x128xf32> to vector<8x32xf32>
    %56 = arith.maximumf %54, %55 : vector<8x32xf32>
    %57 = tpu.concatenate %56, %56, %56, %56 in 1 : vector<8x32xf32>, vector<8x32xf32>, vector<8x32xf32>, vector<8x32xf32> -> vector<8x128xf32>
    %58 = vector.shape_cast %57 : vector<8x128xf32> to vector<8x1x128xf32>
    %59 = vector.broadcast %58 : vector<8x1x128xf32> to vector<8x8x128xf32>
    %60 = arith.subf %37, %59 : vector<8x8x128xf32>
    %61 = math.exp %60 : vector<8x8x128xf32>
    %cst_33 = arith.constant dense<0.000000e+00> : vector<8x128xf32>
    %62 = vector.multi_reduction <add>, %61, %cst_33 [1] : vector<8x8x128xf32> to vector<8x128xf32>
    %63 = vector.shape_cast %19 : vector<8x128xf32> to vector<1x8x128xf32>
    %64 = vector.broadcast %63 : vector<1x8x128xf32> to vector<8x8x128xf32>
    %65 = arith.mulf %61, %64 : vector<8x8x128xf32>
    %cst_34 = arith.constant dense<0.000000e+00> : vector<8x128xf32>
    %66 = vector.multi_reduction <add>, %65, %cst_34 [1] : vector<8x8x128xf32> to vector<8x128xf32>
    %67 = vector.extract_strided_slice %62 {offsets = [0, 0], sizes = [8, 32], strides = [1, 1]} : vector<8x128xf32> to vector<8x32xf32>
    %68 = vector.extract_strided_slice %66 {offsets = [0, 0], sizes = [8, 32], strides = [1, 1]} : vector<8x128xf32> to vector<8x32xf32>
    %69 = vector.extract_strided_slice %62 {offsets = [0, 32], sizes = [8, 32], strides = [1, 1]} : vector<8x128xf32> to vector<8x32xf32>
    %70 = arith.addf %67, %69 : vector<8x32xf32>
    %71 = vector.extract_strided_slice %66 {offsets = [0, 32], sizes = [8, 32], strides = [1, 1]} : vector<8x128xf32> to vector<8x32xf32>
    %72 = arith.addf %68, %71 : vector<8x32xf32>
    %73 = vector.extract_strided_slice %62 {offsets = [0, 64], sizes = [8, 32], strides = [1, 1]} : vector<8x128xf32> to vector<8x32xf32>
    %74 = arith.addf %70, %73 : vector<8x32xf32>
    %75 = vector.extract_strided_slice %66 {offsets = [0, 64], sizes = [8, 32], strides = [1, 1]} : vector<8x128xf32> to vector<8x32xf32>
    %76 = arith.addf %72, %75 : vector<8x32xf32>
    %77 = vector.extract_strided_slice %62 {offsets = [0, 96], sizes = [8, 32], strides = [1, 1]} : vector<8x128xf32> to vector<8x32xf32>
    %78 = arith.addf %74, %77 : vector<8x32xf32>
    %79 = vector.extract_strided_slice %66 {offsets = [0, 96], sizes = [8, 32], strides = [1, 1]} : vector<8x128xf32> to vector<8x32xf32>
    %80 = arith.addf %76, %79 : vector<8x32xf32>
    %81 = tpu.reciprocal %78 {approx = true} : vector<8x32xf32> -> vector<8x32xf32>
    %82 = arith.mulf %80, %81 : vector<8x32xf32>
    %83 = arith.truncf %82 : vector<8x32xf32> to vector<8x32xbf16>
    %c0_35 = arith.constant 0 : index
    %c0_36 = arith.constant 0 : index
    %84 = vector.load %arg13[%c0_35, %c0_36] : memref<32x32xbf16, #tpu.memory_space<vmem>>, vector<32x32xbf16>
    %cst_37 = arith.constant dense<0.000000e+00> : vector<8x32xf32>
    %85 = tpu.matmul %83, %84, %cst_37 {dimension_numbers = #tpu.dot_dimension_numbers<[1], [0], [0], [1], [0, 0, 1, 1], [], []>} : vector<8x32xbf16>, vector<32x32xbf16>, vector<8x32xf32> -> vector<8x32xf32>
    %c0_38 = arith.constant 0 : index
    %c0_39 = arith.constant 0 : index
    %86 = vector.load %arg14[%c0_38, %c0_39] : memref<1x32xf32, #tpu.memory_space<vmem>>, vector<1x32xf32>
    %87 = vector.broadcast %86 : vector<1x32xf32> to vector<8x32xf32>
    %88 = arith.addf %85, %87 : vector<8x32xf32>
    %c0_40 = arith.constant 0 : index
    %c0_41 = arith.constant 0 : index
    %c0_42 = arith.constant 0 : index
    %89 = vector.load %arg15[%c0_40, %c0_41, %c0_42] : memref<1x8x32xf32, #tpu.memory_space<vmem>>, vector<1x8x32xf32>
    %90 = vector.shape_cast %89 : vector<1x8x32xf32> to vector<8x32xf32>
    %91 = vector.shape_cast %88 : vector<8x32xf32> to vector<1x8x32xf32>
    tpu.vector_store %arg15[%c0_40, %c0_41, %c0_42], %91 {strides = array<i32>} : memref<1x8x32xf32, #tpu.memory_space<vmem>>, vector<1x8x32xf32>,
    return
  }
  func.func @transform_0(%arg0: i32, %arg1: i32) -> (i32, i32, i32) {
    %c0_i32 = arith.constant 0 : i32
    %c0_i32_0 = arith.constant 0 : i32
    return %arg0, %arg1, %c0_i32 : i32, i32, i32
  }
  func.func @transform_1(%arg0: i32, %arg1: i32) -> (i32, i32, i32) {
    %c0_i32 = arith.constant 0 : i32
    %c0_i32_0 = arith.constant 0 : i32
    %c0_i32_1 = arith.constant 0 : i32
    return %arg0, %c0_i32, %c0_i32_0 : i32, i32, i32
  }
  func.func @transform_2(%arg0: i32, %arg1: i32) -> (i32, i32, i32) {
    %c0_i32 = arith.constant 0 : i32
    %c0_i32_0 = arith.constant 0 : i32
    return %arg0, %arg1, %c0_i32 : i32, i32, i32
  }
  func.func @transform_3(%arg0: i32, %arg1: i32) -> (i32, i32) {
    %c0_i32 = arith.constant 0 : i32
    %c0_i32_0 = arith.constant 0 : i32
    %c0_i32_1 = arith.constant 0 : i32
    return %c0_i32, %c0_i32_0 : i32, i32
  }
  func.func @transform_4(%arg0: i32, %arg1: i32) -> (i32, i32) {
    %c0_i32 = arith.constant 0 : i32
    %c0_i32_0 = arith.constant 0 : i32
    %c0_i32_1 = arith.constant 0 : i32
    return %c0_i32, %c0_i32_0 : i32, i32
  }
  func.func @transform_5(%arg0: i32, %arg1: i32) -> (i32, i32) {
    %c0_i32 = arith.constant 0 : i32
    %c0_i32_0 = arith.constant 0 : i32
    %c0_i32_1 = arith.constant 0 : i32
    return %c0_i32, %c0_i32_0 : i32, i32
  }
  func.func @transform_6(%arg0: i32, %arg1: i32) -> (i32, i32) {
    %c0_i32 = arith.constant 0 : i32
    %c0_i32_0 = arith.constant 0 : i32
    %c0_i32_1 = arith.constant 0 : i32
    return %c0_i32, %c0_i32_0 : i32, i32
  }
  func.func @transform_7(%arg0: i32, %arg1: i32) -> (i32, i32) {
    %c0_i32 = arith.constant 0 : i32
    %c0_i32_0 = arith.constant 0 : i32
    %c0_i32_1 = arith.constant 0 : i32
    return %c0_i32, %c0_i32_0 : i32, i32
  }
  func.func @transform_8(%arg0: i32, %arg1: i32) -> (i32, i32) {
    %c0_i32 = arith.constant 0 : i32
    %c0_i32_0 = arith.constant 0 : i32
    %c0_i32_1 = arith.constant 0 : i32
    return %c0_i32, %c0_i32_0 : i32, i32
  }
  func.func @transform_9(%arg0: i32, %arg1: i32) -> (i32, i32) {
    %c0_i32 = arith.constant 0 : i32
    %c0_i32_0 = arith.constant 0 : i32
    %c0_i32_1 = arith.constant 0 : i32
    return %c0_i32, %c0_i32_0 : i32, i32
  }
  func.func @transform_10(%arg0: i32, %arg1: i32) -> (i32, i32) {
    %c0_i32 = arith.constant 0 : i32
    %c0_i32_0 = arith.constant 0 : i32
    %c0_i32_1 = arith.constant 0 : i32
    return %c0_i32, %c0_i32_0 : i32, i32
  }
  func.func @transform_11(%arg0: i32, %arg1: i32) -> (i32, i32) {
    %c0_i32 = arith.constant 0 : i32
    %c0_i32_0 = arith.constant 0 : i32
    %c0_i32_1 = arith.constant 0 : i32
    return %c0_i32, %c0_i32_0 : i32, i32
  }
  func.func @transform_12(%arg0: i32, %arg1: i32) -> (i32, i32) {
    %c0_i32 = arith.constant 0 : i32
    %c0_i32_0 = arith.constant 0 : i32
    %c0_i32_1 = arith.constant 0 : i32
    return %c0_i32, %c0_i32_0 : i32, i32
  }
  func.func @transform_13(%arg0: i32, %arg1: i32) -> (i32, i32, i32) {
    %c0_i32 = arith.constant 0 : i32
    %c0_i32_0 = arith.constant 0 : i32
    return %arg0, %arg1, %c0_i32 : i32, i32, i32
  }
  func.func @transform_14(%arg0: i32, %arg1: i32) -> (i32, i32, i32) {
    %c0_i32 = arith.constant 0 : i32
    %c0_i32_0 = arith.constant 0 : i32
    return %arg0, %arg1, %c0_i32 : i32, i32, i32
  }
}

</mosaic_0001>

<llo_original>
// kernel: tpu_custom_call.1
$region0: #{tpu_custom_call.1}
  #allocation0 [shape = 'u32[]', space=smem, size = 0x4, offset = 0x4, fixed_abs, tag = 'smem constant byte address 0x4 - core index']
  #allocation1 [shape = 'u32[72,128]{1,0:T(1,128)}', space=vmem, size = 0x9000, scoped, tag = 'internal scratch']
  %s0 = inlined_call_operand.hbm [shape: f32[2,32,32], index: 0, kind: input, shape index: {}]
  %s1 = inlined_call_operand.hbm [shape: f32[2,8,128], index: 1, kind: input, shape index: {}]
  %s2 = inlined_call_operand.hbm [shape: f32[2,256,128], index: 2, kind: input, shape index: {}]
  %s3 = inlined_call_operand.hbm [shape: bf16[32,128], index: 3, kind: input, shape index: {}]
  %s4 = inlined_call_operand.vmem [shape: f32[1,128], index: 4, kind: input, shape index: {}]
  %s5 = inlined_call_operand.hbm [shape: bf16[128,256], index: 5, kind: input, shape index: {}]
  %s6 = inlined_call_operand.vmem [shape: f32[1,256], index: 6, kind: input, shape index: {}]
  %s7 = inlined_call_operand.hbm [shape: bf16[128,128], index: 7, kind: input, shape index: {}]
  %s8 = inlined_call_operand.vmem [shape: f32[1,128], index: 8, kind: input, shape index: {}]
  %s9 = inlined_call_operand.hbm [shape: bf16[128,128], index: 9, kind: input, shape index: {}]
  %s10 = inlined_call_operand.vmem [shape: f32[1,128], index: 10, kind: input, shape index: {}]
  %s11 = inlined_call_operand.hbm [shape: bf16[32,32], index: 11, kind: input, shape index: {}]
  %s12 = inlined_call_operand.vmem [shape: f32[1,32], index: 12, kind: input, shape index: {}]
  %s13 = inlined_call_operand.hbm [shape: f32[2,32,32], index: 13, kind: output, shape index: {0}]
  %s14 = inlined_call_operand.hbm [shape: bf16[2,256,128], index: 14, kind: output, shape index: {1}]
  %15 = xla_tuple %s13, %s14
  %s16 = sld [smem:[#allocation0]]
  $region125: #{tpu_custom_call.1} parent=0
    _
  %s18 = ssub.s32 1, %s16
  %s19 = scalar_select 0, %s18, %s16
  $region1: #{tpu_custom_call.1} parent=0
    #allocation2 [shape = 'u8[8192]{0}', space=vmem, size = 0x2000, scoped, tag = 'input window, operand 0']
    #allocation3 [shape = 's32[2]{0}', space=sflag, size = 0x8, scoped, tag = 'scoped memory for tpu_custom_call.1']
    #allocation4 [shape = 's32[2]{0}', space=sflag, size = 0x8, scoped, tag = 'scoped memory for tpu_custom_call.1']
    #allocation5 [shape = 'u8[8192]{0}', space=vmem, size = 0x2000, scoped, tag = 'input window, operand 1']
    #allocation6 [shape = 's32[2]{0}', space=sflag, size = 0x8, scoped, tag = 'scoped memory for tpu_custom_call.1']
    #allocation7 [shape = 'u8[65536]{0}', space=vmem, size = 0x10000, scoped, tag = 'input window, operand 2']
    #allocation8 [shape = 'u8[8192]{0}', space=vmem, size = 0x2000, scoped, tag = 'input window, operand 3, single buffered']
    #allocation9 [shape = 's32[1]{0}', space=sflag, size = 0x4, scoped, tag = 'scoped memory for tpu_custom_call.1']
    #allocation10 [shape = 'u8[65536]{0}', space=vmem, size = 0x10000, scoped, tag = 'input window, operand 5, single buffered']
    #allocation11 [shape = 'u8[32768]{0}', space=vmem, size = 0x8000, scoped, tag = 'input window, operand 7, single buffered']
    #allocation12 [shape = 's32[1]{0}', space=sflag, size = 0x4, scoped, tag = 'scoped memory for tpu_custom_call.1']
    #allocation13 [shape = 'u8[32768]{0}', space=vmem, size = 0x8000, scoped, tag = 'input window, operand 9, single buffered']
    #allocation14 [shape = 'u8[8192]{0}', space=vmem, size = 0x2000, scoped, tag = 'input window, operand 11, single buffered']
    #allocation15 [shape = 's32[1]{0}', space=sflag, size = 0x4, scoped, tag = 'scoped memory for tpu_custom_call.1']
    #allocation16 [shape = 'u8[8192]{0}', space=vmem, size = 0x2000, scoped, tag = 'output window, operand 0']
    #allocation17 [shape = 'u8[32768]{0}', space=vmem, size = 0x8000, scoped, tag = 'output window, operand 1']
    #allocation18 [shape = 's32[2]{0}', space=sflag, size = 0x8, scoped, tag = 'scoped memory for tpu_custom_call.1']
    %20 = vsyncpa [#allocation3], 0
    %s21 = scalar_lea.sflag [#allocation3], 1
    %22 = vsyncpa %s21, 0
    %23 = vsyncpa [#allocation6], 0
    %s24 = scalar_lea.sflag [#allocation6], 1
    %25 = vsyncpa %s24, 0
    %26 = vsyncpa [#allocation9], 0
    %27 = vsyncpa [#allocation12], 0
    %28 = vsyncpa [#allocation15], 0
    %29 = vsyncpa [#allocation4], 0
    %s30 = scalar_lea.sflag [#allocation4], 1
    %31 = vsyncpa %s30, 0
    %32 = vsyncpa [#allocation18], 0
    %s33 = scalar_lea.sflag [#allocation18], 1
    %34 = vsyncpa %s33, 0
    loop: start=0, step=1, limit=10
    $region2: #{tpu_custom_call.1} parent=1 // loop_pre_header
      _
    $region3: #{tpu_custom_call.1} parent=1 // loop_header
      %s36 = sphi 0, %s40
      %p37 = scmp.ge.s32.totalorder %s36, 10
      %s43 = sphi 0, %s55
      %s44 = sphi 0, %s51
      %s45 = sphi 0, %s43
      %s46 = sphi 0, %s44
      %s47 = sphi 0, %s45
      %s48 = sphi 0, %s46
      %s60 = sphi 0, %s62
      %s63 = sphi 0, %s60
      %s64 = sphi 0, %s63
      %s80 = sphi 0, %s64
      %s86 = sphi 0, %s88
      %s89 = sphi 0, %s86
      %s90 = sphi 0, %s89
      %s106 = sphi 0, %s90
      %s114 = sphi 0, %s116
      %s117 = sphi 0, %s114
      %s118 = sphi 0, %s117
      %s134 = sphi 0, %s118
      %s138 = sphi 0, %s138
      %s140 = sphi 0, %s138
      %s141 = sphi 0, %s140
      %s155 = sphi 0, %s141
      %s159 = sphi 0, %s159
      %s161 = sphi 0, %s159
      %s162 = sphi 0, %s161
      %s176 = sphi 0, %s162
      %s180 = sphi 0, %s180
      %s182 = sphi 0, %s180
      %s183 = sphi 0, %s182
      %s197 = sphi 0, %s183
      %s201 = sphi 0, %s201
      %s203 = sphi 0, %s201
      %s204 = sphi 0, %s203
      %s218 = sphi 0, %s204
      %s222 = sphi 0, %s222
      %s224 = sphi 0, %s222
      %s225 = sphi 0, %s224
      %s239 = sphi 0, %s225
      %s243 = sphi 0, %s243
      %s245 = sphi 0, %s243
      %s246 = sphi 0, %s245
      %s260 = sphi 0, %s246
      %s264 = sphi 0, %s264
      %s266 = sphi 0, %s264
      %s267 = sphi 0, %s266
      %s281 = sphi 0, %s267
      %s285 = sphi 0, %s285
      %s287 = sphi 0, %s285
      %s288 = sphi 0, %s287
      %s302 = sphi 0, %s288
      %s306 = sphi 0, %s306
      %s308 = sphi 0, %s306
      %s309 = sphi 0, %s308
      %s323 = sphi 0, %s309
      %s327 = sphi 0, %s327
      %s329 = sphi 0, %s327
      %s330 = sphi 0, %s329
      %s344 = sphi 0, %s330
      %s352 = sphi 0, %s354
      %s355 = sphi 0, %s352
      %s356 = sphi 0, %s355
      %s372 = sphi 0, %s356
      %s380 = sphi 0, %s382
      %s383 = sphi 0, %s380
      %s384 = sphi 0, %s383
      %s400 = sphi 0, %s384
    $region4: #{tpu_custom_call.1} parent=1 // loop_header_branch
      %39 = sbr.rel (%p37) target = $region8
    $region5: #{tpu_custom_call.1} parent=1 // loop_body
      %s41 = ssub.s32 %s36, 1
      %s42 = ssub.s32 %s36, 2
      %s49 = sadd.s32 1, %s44
      %p50 = scmp.ge.s32.totalorder %s49, 4
      %s51 = scalar_select %p50, 0, %s49
      %s52 = sadd.s32 1, %s43
      %s53 = scalar_select %p50, %s52, %s43
      %p54 = scmp.ge.s32.totalorder %s53, 2
      %s55 = scalar_select %p54, 0, %s53
      %s56 = ssub.s32 %s43, %s55
      %s57 = ssub.s32 %s44, %s51
      %s58 = sor.u32 %s56, %s57
      %p59 = scmp.eq.s32.totalorder %s58, 0
      %s61 = sadd.s32 %s60, 1
      %s62 = scalar_select %p59, %s60, %s61
      %p65 = pneg %p59
      %p66 = scmp.eq.s32.totalorder %s36, 7
      %p67 = por %p65, %p66
      %p68 = scmp.ne.s32.totalorder %s60, %s63
      %p69 = scmp.eq.s32.totalorder %s36, 0
      %p70 = por %p68, %p69
      %p71 = scmp.ne.s32.totalorder %s60, %s63
      %p72 = scmp.eq.s32.totalorder %s41, 7
      %p73 = por %p71, %p72
      %p74 = scmp.ne.s32.totalorder %s63, %s64
      %p75 = scmp.eq.s32.totalorder %s41, 0
      %p76 = por %p74, %p75
      %p77 = scmp.ne.s32.totalorder %s63, %s64
      %p78 = scmp.eq.s32.totalorder %s42, 7
      %p79 = por %p77, %p78
      %p81 = scmp.ne.s32.totalorder %s64, %s80
      %p82 = scmp.eq.s32.totalorder %s42, 0
      %p83 = por %p81, %p82
      %s84 = ssub.s32 %s43, %s55
      %p85 = scmp.eq.s32.totalorder %s84, 0
      %s87 = sadd.s32 %s86, 1
      %s88 = scalar_select %p85, %s86, %s87
      %p91 = pneg %p85
      %p92 = scmp.eq.s32.totalorder %s36, 7
      %p93 = por %p91, %p92
      %p94 = scmp.ne.s32.totalorder %s86, %s89
      %p95 = scmp.eq.s32.totalorder %s36, 0
      %p96 = por %p94, %p95
      %p97 = scmp.ne.s32.totalorder %s86, %s89
      %p98 = scmp.eq.s32.totalorder %s41, 7
      %p99 = por %p97, %p98
      %p100 = scmp.ne.s32.totalorder %s89, %s90
      %p101 = scmp.eq.s32.totalorder %s41, 0
      %p102 = por %p100, %p101
      %p103 = scmp.ne.s32.totalorder %s89, %s90
      %p104 = scmp.eq.s32.totalorder %s42, 7
      %p105 = por %p103, %p104
      %p107 = scmp.ne.s32.totalorder %s90, %s106
      %p108 = scmp.eq.s32.totalorder %s42, 0
      %p109 = por %p107, %p108
      %s110 = ssub.s32 %s43, %s55
      %s111 = ssub.s32 %s44, %s51
      %s112 = sor.u32 %s110, %s111
      %p113 = scmp.eq.s32.totalorder %s112, 0
      %s115 = sadd.s32 %s114, 1
      %s116 = scalar_select %p113, %s114, %s115
      %p119 = pneg %p113
      %p120 = scmp.eq.s32.totalorder %s36, 7
      %p121 = por %p119, %p120
      %p122 = scmp.ne.s32.totalorder %s114, %s117
      %p123 = scmp.eq.s32.totalorder %s36, 0
      %p124 = por %p122, %p123
      %p125 = scmp.ne.s32.totalorder %s114, %s117
      %p126 = scmp.eq.s32.totalorder %s41, 7
      %p127 = por %p125, %p126
      %p128 = scmp.ne.s32.totalorder %s117, %s118
      %p129 = scmp.eq.s32.totalorder %s41, 0
      %p130 = por %p128, %p129
      %p131 = scmp.ne.s32.totalorder %s117, %s118
      %p132 = scmp.eq.s32.totalorder %s42, 7
      %p133 = por %p131, %p132
      %p135 = scmp.ne.s32.totalorder %s118, %s134
      %p136 = scmp.eq.s32.totalorder %s42, 0
      %p137 = por %p135, %p136
      %s139 = sadd.s32 %s138, 1
      %p142 = scmp.eq.s32.totalorder %s36, 7
      %p143 = scmp.ne.s32.totalorder %s138, %s140
      %p144 = scmp.eq.s32.totalorder %s36, 0
      %p145 = por %p143, %p144
      %p146 = scmp.ne.s32.totalorder %s138, %s140
      %p147 = scmp.eq.s32.totalorder %s41, 7
      %p148 = por %p146, %p147
      %p149 = scmp.ne.s32.totalorder %s140, %s141
      %p150 = scmp.eq.s32.totalorder %s41, 0
      %p151 = por %p149, %p150
      %p152 = scmp.ne.s32.totalorder %s140, %s141
      %p153 = scmp.eq.s32.totalorder %s42, 7
      %p154 = por %p152, %p153
      %p156 = scmp.ne.s32.totalorder %s141, %s155
      %p157 = scmp.eq.s32.totalorder %s42, 0
      %p158 = por %p156, %p157
      %s160 = sadd.s32 %s159, 1
      %p163 = scmp.eq.s32.totalorder %s36, 7
      %p164 = scmp.ne.s32.totalorder %s159, %s161
      %p165 = scmp.eq.s32.totalorder %s36, 0
      %p166 = por %p164, %p165
      %p167 = scmp.ne.s32.totalorder %s159, %s161
      %p168 = scmp.eq.s32.totalorder %s41, 7
      %p169 = por %p167, %p168
      %p170 = scmp.ne.s32.totalorder %s161, %s162
      %p171 = scmp.eq.s32.totalorder %s41, 0
      %p172 = por %p170, %p171
      %p173 = scmp.ne.s32.totalorder %s161, %s162
      %p174 = scmp.eq.s32.totalorder %s42, 7
      %p175 = por %p173, %p174
      %p177 = scmp.ne.s32.totalorder %s162, %s176
      %p178 = scmp.eq.s32.totalorder %s42, 0
      %p179 = por %p177, %p178
      %s181 = sadd.s32 %s180, 1
      %p184 = scmp.eq.s32.totalorder %s36, 7
      %p185 = scmp.ne.s32.totalorder %s180, %s182
      %p186 = scmp.eq.s32.totalorder %s36, 0
      %p187 = por %p185, %p186
      %p188 = scmp.ne.s32.totalorder %s180, %s182
      %p189 = scmp.eq.s32.totalorder %s41, 7
      %p190 = por %p188, %p189
      %p191 = scmp.ne.s32.totalorder %s182, %s183
      %p192 = scmp.eq.s32.totalorder %s41, 0
      %p193 = por %p191, %p192
      %p194 = scmp.ne.s32.totalorder %s182, %s183
      %p195 = scmp.eq.s32.totalorder %s42, 7
      %p196 = por %p194, %p195
      %p198 = scmp.ne.s32.totalorder %s183, %s197
      %p199 = scmp.eq.s32.totalorder %s42, 0
      %p200 = por %p198, %p199
      %s202 = sadd.s32 %s201, 1
      %p205 = scmp.eq.s32.totalorder %s36, 7
      %p206 = scmp.ne.s32.totalorder %s201, %s203
      %p207 = scmp.eq.s32.totalorder %s36, 0
      %p208 = por %p206, %p207
      %p209 = scmp.ne.s32.totalorder %s201, %s203
      %p210 = scmp.eq.s32.totalorder %s41, 7
      %p211 = por %p209, %p210
      %p212 = scmp.ne.s32.totalorder %s203, %s204
      %p213 = scmp.eq.s32.totalorder %s41, 0
      %p214 = por %p212, %p213
      %p215 = scmp.ne.s32.totalorder %s203, %s204
      %p216 = scmp.eq.s32.totalorder %s42, 7
      %p217 = por %p215, %p216
      %p219 = scmp.ne.s32.totalorder %s204, %s218
      %p220 = scmp.eq.s32.totalorder %s42, 0
      %p221 = por %p219, %p220
      %s223 = sadd.s32 %s222, 1
      %p226 = scmp.eq.s32.totalorder %s36, 7
      %p227 = scmp.ne.s32.totalorder %s222, %s224
      %p228 = scmp.eq.s32.totalorder %s36, 0
      %p229 = por %p227, %p228
      %p230 = scmp.ne.s32.totalorder %s222, %s224
      %p231 = scmp.eq.s32.totalorder %s41, 7
      %p232 = por %p230, %p231
      %p233 = scmp.ne.s32.totalorder %s224, %s225
      %p234 = scmp.eq.s32.totalorder %s41, 0
      %p235 = por %p233, %p234
      %p236 = scmp.ne.s32.totalorder %s224, %s225
      %p237 = scmp.eq.s32.totalorder %s42, 7
      %p238 = por %p236, %p237
      %p240 = scmp.ne.s32.totalorder %s225, %s239
      %p241 = scmp.eq.s32.totalorder %s42, 0
      %p242 = por %p240, %p241
      %s244 = sadd.s32 %s243, 1
      %p247 = scmp.eq.s32.totalorder %s36, 7
      %p248 = scmp.ne.s32.totalorder %s243, %s245
      %p249 = scmp.eq.s32.totalorder %s36, 0
      %p250 = por %p248, %p249
      %p251 = scmp.ne.s32.totalorder %s243, %s245
      %p252 = scmp.eq.s32.totalorder %s41, 7
      %p253 = por %p251, %p252
      %p254 = scmp.ne.s32.totalorder %s245, %s246
      %p255 = scmp.eq.s32.totalorder %s41, 0
      %p256 = por %p254, %p255
      %p257 = scmp.ne.s32.totalorder %s245, %s246
      %p258 = scmp.eq.s32.totalorder %s42, 7
      %p259 = por %p257, %p258
      %p261 = scmp.ne.s32.totalorder %s246, %s260
      %p262 = scmp.eq.s32.totalorder %s42, 0
      %p263 = por %p261, %p262
      %s265 = sadd.s32 %s264, 1
      %p268 = scmp.eq.s32.totalorder %s36, 7
      %p269 = scmp.ne.s32.totalorder %s264, %s266
      %p270 = scmp.eq.s32.totalorder %s36, 0
      %p271 = por %p269, %p270
      %p272 = scmp.ne.s32.totalorder %s264, %s266
      %p273 = scmp.eq.s32.totalorder %s41, 7
      %p274 = por %p272, %p273
      %p275 = scmp.ne.s32.totalorder %s266, %s267
      %p276 = scmp.eq.s32.totalorder %s41, 0
      %p277 = por %p275, %p276
      %p278 = scmp.ne.s32.totalorder %s266, %s267
      %p279 = scmp.eq.s32.totalorder %s42, 7
      %p280 = por %p278, %p279
      %p282 = scmp.ne.s32.totalorder %s267, %s281
      %p283 = scmp.eq.s32.totalorder %s42, 0
      %p284 = por %p282, %p283
      %s286 = sadd.s32 %s285, 1
      %p289 = scmp.eq.s32.totalorder %s36, 7
      %p290 = scmp.ne.s32.totalorder %s285, %s287
      %p291 = scmp.eq.s32.totalorder %s36, 0
      %p292 = por %p290, %p291
      %p293 = scmp.ne.s32.totalorder %s285, %s287
      %p294 = scmp.eq.s32.totalorder %s41, 7
      %p295 = por %p293, %p294
      %p296 = scmp.ne.s32.totalorder %s287, %s288
      %p297 = scmp.eq.s32.totalorder %s41, 0
      %p298 = por %p296, %p297
      %p299 = scmp.ne.s32.totalorder %s287, %s288
      %p300 = scmp.eq.s32.totalorder %s42, 7
      %p301 = por %p299, %p300
      %p303 = scmp.ne.s32.totalorder %s288, %s302
      %p304 = scmp.eq.s32.totalorder %s42, 0
      %p305 = por %p303, %p304
      %s307 = sadd.s32 %s306, 1
      %p310 = scmp.eq.s32.totalorder %s36, 7
      %p311 = scmp.ne.s32.totalorder %s306, %s308
      %p312 = scmp.eq.s32.totalorder %s36, 0
      %p313 = por %p311, %p312
      %p314 = scmp.ne.s32.totalorder %s306, %s308
      %p315 = scmp.eq.s32.totalorder %s41, 7
      %p316 = por %p314, %p315
      %p317 = scmp.ne.s32.totalorder %s308, %s309
      %p318 = scmp.eq.s32.totalorder %s41, 0
      %p319 = por %p317, %p318
      %p320 = scmp.ne.s32.totalorder %s308, %s309
      %p321 = scmp.eq.s32.totalorder %s42, 7
      %p322 = por %p320, %p321
      %p324 = scmp.ne.s32.totalorder %s309, %s323
      %p325 = scmp.eq.s32.totalorder %s42, 0
      %p326 = por %p324, %p325
      %s328 = sadd.s32 %s327, 1
      %p331 = scmp.eq.s32.totalorder %s36, 7
      %p332 = scmp.ne.s32.totalorder %s327, %s329
      %p333 = scmp.eq.s32.totalorder %s36, 0
      %p334 = por %p332, %p333
      %p335 = scmp.ne.s32.totalorder %s327, %s329
      %p336 = scmp.eq.s32.totalorder %s41, 7
      %p337 = por %p335, %p336
      %p338 = scmp.ne.s32.totalorder %s329, %s330
      %p339 = scmp.eq.s32.totalorder %s41, 0
      %p340 = por %p338, %p339
      %p341 = scmp.ne.s32.totalorder %s329, %s330
      %p342 = scmp.eq.s32.totalorder %s42, 7
      %p343 = por %p341, %p342
      %p345 = scmp.ne.s32.totalorder %s330, %s344
      %p346 = scmp.eq.s32.totalorder %s42, 0
      %p347 = por %p345, %p346
      %s348 = ssub.s32 %s43, %s55
      %s349 = ssub.s32 %s44, %s51
      %s350 = sor.u32 %s348, %s349
      %p351 = scmp.eq.s32.totalorder %s350, 0
      %s353 = sadd.s32 %s352, 1
      %s354 = scalar_select %p351, %s352, %s353
      %p357 = pneg %p351
      %p358 = scmp.eq.s32.totalorder %s36, 7
      %p359 = por %p357, %p358
      %p360 = scmp.ne.s32.totalorder %s352, %s355
      %p361 = scmp.eq.s32.totalorder %s36, 0
      %p362 = por %p360, %p361
      %p363 = scmp.ne.s32.totalorder %s352, %s355
      %p364 = scmp.eq.s32.totalorder %s41, 7
      %p365 = por %p363, %p364
      %p366 = scmp.ne.s32.totalorder %s355, %s356
      %p367 = scmp.eq.s32.totalorder %s41, 0
      %p368 = por %p366, %p367
      %p369 = scmp.ne.s32.totalorder %s355, %s356
      %p370 = scmp.eq.s32.totalorder %s42, 7
      %p371 = por %p369, %p370
      %p373 = scmp.ne.s32.totalorder %s356, %s372
      %p374 = scmp.eq.s32.totalorder %s42, 0
      %p375 = por %p373, %p374
      %s376 = ssub.s32 %s43, %s55
      %s377 = ssub.s32 %s44, %s51
      %s378 = sor.u32 %s376, %s377
      %p379 = scmp.eq.s32.totalorder %s378, 0
      %s381 = sadd.s32 %s380, 1
      %s382 = scalar_select %p379, %s380, %s381
      %p385 = pneg %p379
      %p386 = scmp.eq.s32.totalorder %s36, 7
      %p387 = por %p385, %p386
      %p388 = scmp.ne.s32.totalorder %s380, %s383
      %p389 = scmp.eq.s32.totalorder %s36, 0
      %p390 = por %p388, %p389
      %p391 = scmp.ne.s32.totalorder %s380, %s383
      %p392 = scmp.eq.s32.totalorder %s41, 7
      %p393 = por %p391, %p392
      %p394 = scmp.ne.s32.totalorder %s383, %s384
      %p395 = scmp.eq.s32.totalorder %s41, 0
      %p396 = por %p394, %p395
      %p397 = scmp.ne.s32.totalorder %s383, %s384
      %p398 = scmp.eq.s32.totalorder %s42, 7
      %p399 = por %p397, %p398
      %p401 = scmp.ne.s32.totalorder %s384, %s400
      %p402 = scmp.eq.s32.totalorder %s42, 0
      %p403 = por %p401, %p402
      %p404 = scmp.le.s32.totalorder 1, %s36
      %p405 = scmp.lt.s32.totalorder %s36, 9
      %p406 = pnand %p404, %p405
      %p407 = pneg %p406
      // Predicated region
      $region9: #{tpu_custom_call.1} parent=5 // pred_check
        _
      $region10: #{tpu_custom_call.1} parent=5 // pred_check_branch
        %409 = sbr.rel (%p406) target = $region12
      $region11: #{tpu_custom_call.1} parent=5 // pred_region
        %s410 = ssub.s32 %s36, 1
        // Predicated region
        $region13: #{tpu_custom_call.1} parent=11 // pred_check
          %p411 = pneg %p151
        $region14: #{tpu_custom_call.1} parent=11 // pred_check_branch
          %413 = sbr.rel (%p411) target = $region16
        $region15: #{tpu_custom_call.1} parent=11 // pred_region
          %415 = vsyncadd [#allocation9], 0
          %s416 = sshll.u32 %s3, 4
          %s417 = int_to_ptr.hbm [resolvable:$true] %s416
          %s418 = sshll.u32 [#allocation8], 4
          %s419 = int_to_ptr.vmem [resolvable:$true] %s418
          %424 = dma.hbm_to_vmem [thread:$0]  %s417, 256, %s419, [#allocation9], 64, 64, 4
        $region16: #{tpu_custom_call.1} parent=11 // pred_fallthru
          _
        // Predicated region
        $region17: #{tpu_custom_call.1} parent=11 // pred_check
          %p425 = pneg %p172
        $region18: #{tpu_custom_call.1} parent=11 // pred_check_branch
          %427 = sbr.rel (%p425) target = $region20
        $region19: #{tpu_custom_call.1} parent=11 // pred_region
          _
        $region20: #{tpu_custom_call.1} parent=11 // pred_fallthru
          _
        // Predicated region
        $region21: #{tpu_custom_call.1} parent=11 // pred_check
          %p428 = pneg %p193
        $region22: #{tpu_custom_call.1} parent=11 // pred_check_branch
          %430 = sbr.rel (%p428) target = $region24
        $region23: #{tpu_custom_call.1} parent=11 // pred_region
          %432 = vsyncadd [#allocation9], 0
          %s433 = sshll.u32 %s5, 4
          %s434 = int_to_ptr.hbm [resolvable:$true] %s433
          %s435 = sshll.u32 [#allocation10], 4
          %s436 = int_to_ptr.vmem [resolvable:$true] %s435
          %441 = dma.hbm_to_vmem [thread:$0]  %s434, 2048, %s436, [#allocation9], 128, 128, 8
        $region24: #{tpu_custom_call.1} parent=11 // pred_fallthru
          _
        // Predicated region
        $region25: #{tpu_custom_call.1} parent=11 // pred_check
          %p442 = pneg %p214
        $region26: #{tpu_custom_call.1} parent=11 // pred_check_branch
          %444 = sbr.rel (%p442) target = $region28
        $region27: #{tpu_custom_call.1} parent=11 // pred_region
          _
        $region28: #{tpu_custom_call.1} parent=11 // pred_fallthru
          _
        // Predicated region
        $region29: #{tpu_custom_call.1} parent=11 // pred_check
          %p445 = pneg %p235
        $region30: #{tpu_custom_call.1} parent=11 // pred_check_branch
          %447 = sbr.rel (%p445) target = $region32
        $region31: #{tpu_custom_call.1} parent=11 // pred_region
          %449 = vsyncadd [#allocation12], 0
          %s450 = sshll.u32 %s7, 4
          %s451 = int_to_ptr.hbm [resolvable:$true] %s450
          %s452 = sshll.u32 [#allocation11], 4
          %s453 = int_to_ptr.vmem [resolvable:$true] %s452
          %458 = dma.hbm_to_vmem [thread:$0]  %s451, 1024, %s453, [#allocation12], 64, 64, 4
        $region32: #{tpu_custom_call.1} parent=11 // pred_fallthru
          _
        // Predicated region
        $region33: #{tpu_custom_call.1} parent=11 // pred_check
          %p459 = pneg %p256
        $region34: #{tpu_custom_call.1} parent=11 // pred_check_branch
          %461 = sbr.rel (%p459) target = $region36
        $region35: #{tpu_custom_call.1} parent=11 // pred_region
          _
        $region36: #{tpu_custom_call.1} parent=11 // pred_fallthru
          _
        // Predicated region
        $region37: #{tpu_custom_call.1} parent=11 // pred_check
          %p462 = pneg %p277
        $region38: #{tpu_custom_call.1} parent=11 // pred_check_branch
          %464 = sbr.rel (%p462) target = $region40
        $region39: #{tpu_custom_call.1} parent=11 // pred_region
          %466 = vsyncadd [#allocation12], 0
          %s467 = sshll.u32 %s9, 4
          %s468 = int_to_ptr.hbm [resolvable:$true] %s467
          %s469 = sshll.u32 [#allocation13], 4
          %s470 = int_to_ptr.vmem [resolvable:$true] %s469
          %475 = dma.hbm_to_vmem [thread:$0]  %s468, 1024, %s470, [#allocation12], 64, 64, 4
        $region40: #{tpu_custom_call.1} parent=11 // pred_fallthru
          _
        // Predicated region
        $region41: #{tpu_custom_call.1} parent=11 // pred_check
          %p476 = pneg %p298
        $region42: #{tpu_custom_call.1} parent=11 // pred_check_branch
          %478 = sbr.rel (%p476) target = $region44
        $region43: #{tpu_custom_call.1} parent=11 // pred_region
          _
        $region44: #{tpu_custom_call.1} parent=11 // pred_fallthru
          _
        // Predicated region
        $region45: #{tpu_custom_call.1} parent=11 // pred_check
          %p479 = pneg %p319
        $region46: #{tpu_custom_call.1} parent=11 // pred_check_branch
          %481 = sbr.rel (%p479) target = $region48
        $region47: #{tpu_custom_call.1} parent=11 // pred_region
          %483 = vsyncadd [#allocation15], 0
          %s484 = sshll.u32 %s11, 4
          %s485 = int_to_ptr.hbm [resolvable:$true] %s484
          %s486 = sshll.u32 [#allocation14], 4
          %s487 = int_to_ptr.vmem [resolvable:$true] %s486
          %492 = dma.hbm_to_vmem [thread:$0]  %s485, 256, %s487, [#allocation15], 64, 64, 4
        $region48: #{tpu_custom_call.1} parent=11 // pred_fallthru
          _
        // Predicated region
        $region49: #{tpu_custom_call.1} parent=11 // pred_check
          %p493 = pneg %p340
        $region50: #{tpu_custom_call.1} parent=11 // pred_check_branch
          %495 = sbr.rel (%p493) target = $region52
        $region51: #{tpu_custom_call.1} parent=11 // pred_region
          _
        $region52: #{tpu_custom_call.1} parent=11 // pred_fallthru
          _
      $region12: #{tpu_custom_call.1} parent=5 // pred_fallthru
        _
      %p496 = scmp.lt.s32.totalorder %s36, 8
      // Predicated region
      $region53: #{tpu_custom_call.1} parent=5 // pred_check
        %p497 = pneg %p496
      $region54: #{tpu_custom_call.1} parent=5 // pred_check_branch
        %499 = sbr.rel (%p497) target = $region56
      $region55: #{tpu_custom_call.1} parent=5 // pred_region
        // Predicated region
        $region57: #{tpu_custom_call.1} parent=55 // pred_check
          %p500 = pneg %p70
        $region58: #{tpu_custom_call.1} parent=55 // pred_check_branch
          %502 = sbr.rel (%p500) target = $region60
        $region59: #{tpu_custom_call.1} parent=55 // pred_region
          %s503 = sand.u32 %s60, 1
          %s504 = scalar_lea.sflag [#allocation3], %s503
          %s505 = sand.u32 %s60, 1
          %s506 = smul.addr %s505, 8
          %s507 = scalar_lea.vmem [#allocation2], %s506
          %509 = vsyncadd %s504, 0
          %s510 = smul.addr %s43, 4
          %s511 = sadd.s32 %s44, %s510
          %s512 = smul.addr %s511, 8
          %s513 = scalar_lea.hbm %s0, %s512
          %s515 = sshll.u32 %s513, 4
          %s516 = int_to_ptr.hbm [resolvable:$true] %s515
          %s517 = sshll.u32 %s507, 4
          %s518 = int_to_ptr.vmem [resolvable:$true] %s517
          %520 = dma.hbm_to_vmem [thread:$0]  %s516, 128, %s518, %s504
        $region60: #{tpu_custom_call.1} parent=55 // pred_fallthru
          _
        // Predicated region
        $region61: #{tpu_custom_call.1} parent=55 // pred_check
          %p521 = pneg %p96
        $region62: #{tpu_custom_call.1} parent=55 // pred_check_branch
          %523 = sbr.rel (%p521) target = $region64
        $region63: #{tpu_custom_call.1} parent=55 // pred_region
          %s524 = sand.u32 %s36, 1
          %s525 = scalar_lea.sflag [#allocation6], %s524
          %s526 = sand.u32 %s86, 1
          %s527 = smul.addr %s526, 8
          %s528 = scalar_lea.vmem [#allocation5], %s527
          %530 = vsyncadd %s525, 0
          %s531 = smul.addr %s43, 8
          %s532 = scalar_lea.hbm %s1, %s531
          %s534 = sshll.u32 %s532, 4
          %s535 = int_to_ptr.hbm [resolvable:$true] %s534
          %s536 = sshll.u32 %s528, 4
          %s537 = int_to_ptr.vmem [resolvable:$true] %s536
          %539 = dma.hbm_to_vmem [thread:$0]  %s535, 128, %s537, %s525
        $region64: #{tpu_custom_call.1} parent=55 // pred_fallthru
          _
        // Predicated region
        $region65: #{tpu_custom_call.1} parent=55 // pred_check
          %p540 = pneg %p124
        $region66: #{tpu_custom_call.1} parent=55 // pred_check_branch
          %542 = sbr.rel (%p540) target = $region68
        $region67: #{tpu_custom_call.1} parent=55 // pred_region
          %s543 = sand.u32 %s36, 1
          %s544 = scalar_lea.sflag [#allocation6], %s543
          %s545 = sand.u32 %s114, 1
          %s546 = smul.addr %s545, 64
          %s547 = scalar_lea.vmem [#allocation7], %s546
          %s548 = smul.u32 8, %s44
          %550 = vsyncadd %s544, 0
          %s551 = smul.addr %s43, 32
          %s552 = sadd.s32 %s548, %s551
          %s553 = smul.addr %s552, 8
          %s554 = scalar_lea.hbm %s2, %s553
          %s555 = sshll.u32 %s554, 4
          %s556 = int_to_ptr.hbm [resolvable:$true] %s555
          %s557 = sshll.u32 %s547, 4
          %s558 = int_to_ptr.vmem [resolvable:$true] %s557
          %563 = dma.hbm_to_vmem [thread:$0]  %s556, 1024, %s558, %s544, 128, 128, 8
        $region68: #{tpu_custom_call.1} parent=55 // pred_fallthru
          _
      $region56: #{tpu_custom_call.1} parent=5 // pred_fallthru
        _
      %p564 = scmp.le.s32.totalorder 1, %s36
      %p565 = scmp.lt.s32.totalorder %s36, 9
      %p566 = pnand %p564, %p565
      %p567 = pneg %p566
      // Predicated region
      $region69: #{tpu_custom_call.1} parent=5 // pred_check
        _
      $region70: #{tpu_custom_call.1} parent=5 // pred_check_branch
        %569 = sbr.rel (%p566) target = $region72
      $region71: #{tpu_custom_call.1} parent=5 // pred_region
        %s570 = ssub.s32 %s36, 1
        %s571 = sand.u32 %s63, 1
        %s572 = scalar_lea.sflag [#allocation3], %s571
        %s573 = sand.u32 %s63, 1
        %s574 = smul.addr %s573, 8
        %s575 = scalar_lea.vmem [#allocation2], %s574
        // Predicated region
        $region73: #{tpu_custom_call.1} parent=71 // pred_check
          %p576 = pneg %p76
        $region74: #{tpu_custom_call.1} parent=71 // pred_check_branch
          %578 = sbr.rel (%p576) target = $region76
        $region75: #{tpu_custom_call.1} parent=71 // pred_region
          %580 = dma.done %s572, 128
        $region76: #{tpu_custom_call.1} parent=71 // pred_fallthru
          _
        %s581 = sand.u32 %s41, 1
        %s582 = scalar_lea.sflag [#allocation6], %s581
        %s583 = sand.u32 %s89, 1
        %s584 = smul.addr %s583, 8
        %s585 = scalar_lea.vmem [#allocation5], %s584
        // Predicated region
        $region77: #{tpu_custom_call.1} parent=71 // pred_check
          %p586 = pneg %p102
        $region78: #{tpu_custom_call.1} parent=71 // pred_check_branch
          %588 = sbr.rel (%p586) target = $region80
        $region79: #{tpu_custom_call.1} parent=71 // pred_region
          %590 = dma.done %s582, 128
        $region80: #{tpu_custom_call.1} parent=71 // pred_fallthru
          _
        %s591 = sand.u32 %s41, 1
        %s592 = scalar_lea.sflag [#allocation6], %s591
        %s593 = sand.u32 %s117, 1
        %s594 = smul.addr %s593, 64
        %s595 = scalar_lea.vmem [#allocation7], %s594
        // Predicated region
        $region81: #{tpu_custom_call.1} parent=71 // pred_check
          %p596 = pneg %p130
        $region82: #{tpu_custom_call.1} parent=71 // pred_check_branch
          %598 = sbr.rel (%p596) target = $region84
        $region83: #{tpu_custom_call.1} parent=71 // pred_region
          %600 = dma.done %s592, 1024
        $region84: #{tpu_custom_call.1} parent=71 // pred_fallthru
          _
        // Predicated region
        $region85: #{tpu_custom_call.1} parent=71 // pred_check
          %p601 = pneg %p151
        $region86: #{tpu_custom_call.1} parent=71 // pred_check_branch
          %603 = sbr.rel (%p601) target = $region88
        $region87: #{tpu_custom_call.1} parent=71 // pred_region
          %605 = dma.done [#allocation9], 256
        $region88: #{tpu_custom_call.1} parent=71 // pred_fallthru
          _
        // Predicated region
        $region89: #{tpu_custom_call.1} parent=71 // pred_check
          %p606 = pneg %p193
        $region90: #{tpu_custom_call.1} parent=71 // pred_check_branch
          %608 = sbr.rel (%p606) target = $region92
        $region91: #{tpu_custom_call.1} parent=71 // pred_region
          %610 = dma.done [#allocation9], 2048
        $region92: #{tpu_custom_call.1} parent=71 // pred_fallthru
          _
        // Predicated region
        $region93: #{tpu_custom_call.1} parent=71 // pred_check
          %p611 = pneg %p235
        $region94: #{tpu_custom_call.1} parent=71 // pred_check_branch
          %613 = sbr.rel (%p611) target = $region96
        $region95: #{tpu_custom_call.1} parent=71 // pred_region
          %615 = dma.done [#allocation12], 1024
        $region96: #{tpu_custom_call.1} parent=71 // pred_fallthru
          _
        // Predicated region
        $region97: #{tpu_custom_call.1} parent=71 // pred_check
          %p616 = pneg %p277
        $region98: #{tpu_custom_call.1} parent=71 // pred_check_branch
          %618 = sbr.rel (%p616) target = $region100
        $region99: #{tpu_custom_call.1} parent=71 // pred_region
          %620 = dma.done [#allocation12], 1024
        $region100: #{tpu_custom_call.1} parent=71 // pred_fallthru
          _
        // Predicated region
        $region101: #{tpu_custom_call.1} parent=71 // pred_check
          %p621 = pneg %p319
        $region102: #{tpu_custom_call.1} parent=71 // pred_check_branch
          %623 = sbr.rel (%p621) target = $region104
        $region103: #{tpu_custom_call.1} parent=71 // pred_region
          %625 = dma.done [#allocation15], 256
        $region104: #{tpu_custom_call.1} parent=71 // pred_fallthru
          _
        %s626 = sand.u32 %s63, 1
        %s627 = scalar_lea.sflag [#allocation3], %s626
        %s628 = sand.u32 %s63, 1
        %s629 = smul.addr %s628, 8
        %s630 = scalar_lea.vmem [#allocation2], %s629
        %p631 = pneg %p76
        %p632 = pneg %p73
        %s633 = sand.u32 %s41, 1
        %s634 = scalar_lea.sflag [#allocation6], %s633
        %s635 = sand.u32 %s89, 1
        %s636 = smul.addr %s635, 8
        %s637 = scalar_lea.vmem [#allocation5], %s636
        %p638 = pneg %p102
        %p639 = pneg %p99
        %s640 = sand.u32 %s41, 1
        %s641 = scalar_lea.sflag [#allocation6], %s640
        %s642 = sand.u32 %s117, 1
        %s643 = smul.addr %s642, 64
        %s644 = scalar_lea.vmem [#allocation7], %s643
        %p645 = pneg %p130
        %p646 = pneg %p127
        %p647 = pneg %p151
        %p648 = pneg %p148
        %p649 = pneg %p172
        %p650 = pneg %p169
        %p651 = pneg %p193
        %p652 = pneg %p190
        %p653 = pneg %p214
        %p654 = pneg %p211
        %p655 = pneg %p235
        %p656 = pneg %p232
        %p657 = pneg %p256
        %p658 = pneg %p253
        %p659 = pneg %p277
        %p660 = pneg %p274
        %p661 = pneg %p298
        %p662 = pneg %p295
        %p663 = pneg %p319
        %p664 = pneg %p316
        %p665 = pneg %p340
        %p666 = pneg %p337
        %p667 = pneg %p368
        %p668 = pneg %p365
        %s669 = sand.u32 %s355, 1
        %s670 = scalar_lea.sflag [#allocation4], %s669
        %s671 = sand.u32 %s355, 1
        %s672 = smul.addr %s671, 8
        %s673 = scalar_lea.vmem [#allocation16], %s672
        %p674 = pneg %p396
        %p675 = pneg %p393
        %s676 = sand.u32 %s383, 1
        %s677 = scalar_lea.sflag [#allocation18], %s676
        %s678 = sand.u32 %s383, 1
        %s679 = smul.addr %s678, 32
        %s680 = scalar_lea.vmem [#allocation17], %s679
        %s681 = smul.u32 8, %s46
        %s682 = smul.u32 8, %s46
        %v684 = vld [vmem:[%s575] sm:$0xff]
        %v685 = vpack.c.bf16 %v684, %v684
        %v686 = vld [vmem:[#allocation8] sm:$0xf]
        %v687 = vld [vmem:[#allocation8 + $0x4] sm:$0xf]
        %v688 = vld [vmem:[#allocation8 + $0x8] sm:$0xf]
        %v689 = vld [vmem:[#allocation8 + $0xc] sm:$0xf]
        %v690 = vld [vmem:[%s4] sm:$0x1]
        %v692 = vperm.slane %v690, 0
        %v698 = vunpack.c.l.b16 %v686
        %v699 = vunpack.c.l.b16 %v687
        %v700 = vunpack.c.l.b16 %v688
        %v701 = vunpack.c.l.b16 %v689
        %v702 = vpack.c.b16 %v699, %v698
        %v703 = vpack.c.b16 %v701, %v700
        %vm706 = vcmask 261120
        %v708 = vsel %vm706, %v685, 0
        %710 = vmatpush.bf16.msra.mxu0 0
        %711 = vmatpush.bf16.msra.mxu0 0
        %712 = vmatpush.bf16.msra.mxu0 0
        %713 = vmatpush.bf16.msra.mxu0 0
        %714 = vmatpush.bf16.msra.mxu0 0
        %715 = vmatpush.bf16.msra.mxu0 0
        %716 = vmatpush.bf16.msra.mxu0 %v703
        %717 = vmatpush.bf16.msra.mxu0 %v702
        %718 = vmatmul.bf16.gmra.mxu0 %v708
        %v719 = vpop.f32.mrf.mxu0
        %v720 = vadd.f32 %v692, %v719
        %v721 = vpop.f32.mrf.mxu0
        %722 = vdwg.mxu0
        %v723 = vmul.f32 %v720, 0.35355338
        %v724 = vld [vmem:[%s585] sm:$0xff]
        %v725 = vpack.c.bf16 %v724, %v724
        %v726 = vld [vmem:[#allocation10] sm:$0xff]
        %v727 = vld [vmem:[#allocation10 + $0x8] sm:$0xff]
        %v728 = vld [vmem:[#allocation10 + $0x10] sm:$0xff]
        %v729 = vld [vmem:[#allocation10 + $0x18] sm:$0xff]
        %v730 = vld [vmem:[#allocation10 + $0x20] sm:$0xff]
        %v731 = vld [vmem:[#allocation10 + $0x28] sm:$0xff]
        %v732 = vld [vmem:[#allocation10 + $0x30] sm:$0xff]
        %v733 = vld [vmem:[#allocation10 + $0x38] sm:$0xff]
        %v734 = vld [vmem:[#allocation10 + $0x40] sm:$0xff]
        %v735 = vld [vmem:[#allocation10 + $0x48] sm:$0xff]
        %v736 = vld [vmem:[#allocation10 + $0x50] sm:$0xff]
        %v737 = vld [vmem:[#allocation10 + $0x58] sm:$0xff]
        %v738 = vld [vmem:[#allocation10 + $0x60] sm:$0xff]
        %v739 = vld [vmem:[#allocation10 + $0x68] sm:$0xff]
        %v740 = vld [vmem:[#allocation10 + $0x70] sm:$0xff]
        %v741 = vld [vmem:[#allocation10 + $0x78] sm:$0xff]
        %v742 = vld [vmem:[%s6] sm:$0x3]
        %v744 = vperm.slane %v742, 0
        %v745 = vperm.slane %v742, 1
        %v764 = vunpack.c.l.b16 %v726
        %v765 = vunpack.c.h.b16 %v726
        %v766 = vunpack.c.l.b16 %v727
        %v767 = vunpack.c.h.b16 %v727
        %v768 = vunpack.c.l.b16 %v728
        %v769 = vunpack.c.h.b16 %v728
        %v770 = vunpack.c.l.b16 %v729
        %v771 = vunpack.c.h.b16 %v729
        %v772 = vunpack.c.l.b16 %v730
        %v773 = vunpack.c.h.b16 %v730
        %v774 = vunpack.c.l.b16 %v731
        %v775 = vunpack.c.h.b16 %v731
        %v776 = vunpack.c.l.b16 %v732
        %v777 = vunpack.c.h.b16 %v732
        %v778 = vunpack.c.l.b16 %v733
        %v779 = vunpack.c.h.b16 %v733
        %v780 = vunpack.c.l.b16 %v734
        %v781 = vunpack.c.h.b16 %v734
        %v782 = vunpack.c.l.b16 %v735
        %v783 = vunpack.c.h.b16 %v735
        %v784 = vunpack.c.l.b16 %v736
        %v785 = vunpack.c.h.b16 %v736
        %v786 = vunpack.c.l.b16 %v737
        %v787 = vunpack.c.h.b16 %v737
        %v788 = vunpack.c.l.b16 %v738
        %v789 = vunpack.c.h.b16 %v738
        %v790 = vunpack.c.l.b16 %v739
        %v791 = vunpack.c.h.b16 %v739
        %v792 = vunpack.c.l.b16 %v740
        %v793 = vunpack.c.h.b16 %v740
        %v794 = vunpack.c.l.b16 %v741
        %v795 = vunpack.c.h.b16 %v741
        %v796 = vpack.c.b16 %v766, %v764
        %v797 = vpack.c.b16 %v767, %v765
        %v798 = vpack.c.b16 %v770, %v768
        %v799 = vpack.c.b16 %v771, %v769
        %v800 = vpack.c.b16 %v774, %v772
        %v801 = vpack.c.b16 %v775, %v773
        %v802 = vpack.c.b16 %v778, %v776
        %v803 = vpack.c.b16 %v779, %v777
        %v804 = vpack.c.b16 %v782, %v780
        %v805 = vpack.c.b16 %v783, %v781
        %v806 = vpack.c.b16 %v786, %v784
        %v807 = vpack.c.b16 %v787, %v785
        %v808 = vpack.c.b16 %v790, %v788
        %v809 = vpack.c.b16 %v791, %v789
        %v810 = vpack.c.b16 %v794, %v792
        %v811 = vpack.c.b16 %v795, %v793
        %828 = vmatpush.bf16.msra.mxu0 %v810
        %829 = vmatpush.bf16.msra.mxu0 %v808
        %830 = vmatpush.bf16.msra.mxu0 %v806
        %831 = vmatpush.bf16.msra.mxu0 %v804
        %832 = vmatpush.bf16.msra.mxu0 %v802
        %833 = vmatpush.bf16.msra.mxu0 %v800
        %834 = vmatpush.bf16.msra.mxu0 %v798
        %835 = vmatpush.bf16.msra.mxu0 %v796
        %836 = vmatmul.bf16.gmra.mxu0 %v725
        %v837 = vpop.f32.mrf.mxu0
        %v838 = vadd.f32 %v744, %v837
        %v839 = vpop.f32.mrf.mxu0
        %840 = vdwg.mxu0
        %841 = vmatpush.bf16.msra.mxu0 %v811
        %842 = vmatpush.bf16.msra.mxu0 %v809
        %843 = vmatpush.bf16.msra.mxu0 %v807
        %844 = vmatpush.bf16.msra.mxu0 %v805
        %845 = vmatpush.bf16.msra.mxu0 %v803
        %846 = vmatpush.bf16.msra.mxu0 %v801
        %847 = vmatpush.bf16.msra.mxu0 %v799
        %848 = vmatpush.bf16.msra.mxu0 %v797
        %849 = vmatmul.bf16.gmra.mxu0 %v725
        %v850 = vpop.f32.mrf.mxu0
        %v851 = vadd.f32 %v745, %v850
        %v852 = vpop.f32.mrf.mxu0
        %853 = vdwg.mxu0
        %v854 = vld [vmem:[%s595] sm:$0xff]
        %v855 = vld [vmem:[%s595 + $0x8] sm:$0xff]
        %v856 = vld [vmem:[%s595 + $0x10] sm:$0xff]
        %v857 = vld [vmem:[%s595 + $0x18] sm:$0xff]
        %v858 = vld [vmem:[%s595 + $0x20] sm:$0xff]
        %v859 = vld [vmem:[%s595 + $0x28] sm:$0xff]
        %v860 = vld [vmem:[%s595 + $0x30] sm:$0xff]
        %v861 = vld [vmem:[%s595 + $0x38] sm:$0xff]
        %v862 = vpack.c.bf16 %v855, %v854
        %v863 = vpack.c.bf16 %v857, %v856
        %v864 = vpack.c.bf16 %v859, %v858
        %v865 = vpack.c.bf16 %v861, %v860
        %v866 = vld [vmem:[#allocation11] sm:$0xf]
        %v867 = vld [vmem:[#allocation11 + $0x4] sm:$0xf]
        %v868 = vld [vmem:[#allocation11 + $0x8] sm:$0xf]
        %v869 = vld [vmem:[#allocation11 + $0xc] sm:$0xf]
        %v870 = vld [vmem:[#allocation11 + $0x10] sm:$0xf]
        %v871 = vld [vmem:[#allocation11 + $0x14] sm:$0xf]
        %v872 = vld [vmem:[#allocation11 + $0x18] sm:$0xf]
        %v873 = vld [vmem:[#allocation11 + $0x1c] sm:$0xf]
        %v874 = vld [vmem:[#allocation11 + $0x20] sm:$0xf]
        %v875 = vld [vmem:[#allocation11 + $0x24] sm:$0xf]
        %v876 = vld [vmem:[#allocation11 + $0x28] sm:$0xf]
        %v877 = vld [vmem:[#allocation11 + $0x2c] sm:$0xf]
        %v878 = vld [vmem:[#allocation11 + $0x30] sm:$0xf]
        %v879 = vld [vmem:[#allocation11 + $0x34] sm:$0xf]
        %v880 = vld [vmem:[#allocation11 + $0x38] sm:$0xf]
        %v881 = vld [vmem:[#allocation11 + $0x3c] sm:$0xf]
        %v882 = vld [vmem:[%s8] sm:$0x1]
        %v884 = vperm.slane %v882, 0
        %v902 = vunpack.c.l.b16 %v866
        %v903 = vunpack.c.l.b16 %v867
        %v904 = vunpack.c.l.b16 %v868
        %v905 = vunpack.c.l.b16 %v869
        %v906 = vunpack.c.l.b16 %v870
        %v907 = vunpack.c.l.b16 %v871
        %v908 = vunpack.c.l.b16 %v872
        %v909 = vunpack.c.l.b16 %v873
        %v910 = vunpack.c.l.b16 %v874
        %v911 = vunpack.c.l.b16 %v875
        %v912 = vunpack.c.l.b16 %v876
        %v913 = vunpack.c.l.b16 %v877
        %v914 = vunpack.c.l.b16 %v878
        %v915 = vunpack.c.l.b16 %v879
        %v916 = vunpack.c.l.b16 %v880
        %v917 = vunpack.c.l.b16 %v881
        %v918 = vpack.c.b16 %v903, %v902
        %v919 = vpack.c.b16 %v905, %v904
        %v920 = vpack.c.b16 %v907, %v906
        %v921 = vpack.c.b16 %v909, %v908
        %v922 = vpack.c.b16 %v911, %v910
        %v923 = vpack.c.b16 %v913, %v912
        %v924 = vpack.c.b16 %v915, %v914
        %v925 = vpack.c.b16 %v917, %v916
        %934 = vmatpush.bf16.msra.mxu0 %v925
        %935 = vmatpush.bf16.msra.mxu0 %v924
        %936 = vmatpush.bf16.msra.mxu0 %v923
        %937 = vmatpush.bf16.msra.mxu0 %v922
        %938 = vmatpush.bf16.msra.mxu0 %v921
        %939 = vmatpush.bf16.msra.mxu0 %v920
        %940 = vmatpush.bf16.msra.mxu0 %v919
        %941 = vmatpush.bf16.msra.mxu0 %v918
        %942 = vmatmul.bf16.gmra.mxu0 %v862
        %v943 = vpop.f32.mrf.mxu0
        %v944 = vadd.f32 %v884, %v943
        %v945 = vpop.f32.mrf.mxu0
        %v946 = vadd.f32 %v884, %v945
        %947 = vmatmul.bf16.gmra.mxu0 %v863
        %v948 = vpop.f32.mrf.mxu0
        %v949 = vadd.f32 %v884, %v948
        %v950 = vpop.f32.mrf.mxu0
        %v951 = vadd.f32 %v884, %v950
        %952 = vmatmul.bf16.gmra.mxu0 %v864
        %v953 = vpop.f32.mrf.mxu0
        %v954 = vadd.f32 %v884, %v953
        %v955 = vpop.f32.mrf.mxu0
        %v956 = vadd.f32 %v884, %v955
        %957 = vmatmul.bf16.gmra.mxu0 %v865
        %v958 = vpop.f32.mrf.mxu0
        %v959 = vadd.f32 %v884, %v958
        %v960 = vpop.f32.mrf.mxu0
        %v961 = vadd.f32 %v884, %v960
        %962 = vdwg.mxu0
        %v964 = vrot.slane %v723, 1
        %v965 = vrot.slane %v723, 2
        %v966 = vrot.slane %v723, 3
        %v967 = vrot.slane %v723, 4
        %v968 = vrot.slane %v723, 5
        %v969 = vrot.slane %v723, 6
        %v970 = vrot.slane %v723, 7
        %v971 = vperm.slane %v723, 0
        %v972 = vperm.slane %v964, 0
        %v973 = vperm.slane %v965, 0
        %v974 = vperm.slane %v966, 0
        %v975 = vperm.slane %v967, 0
        %v976 = vperm.slane %v968, 0
        %v977 = vperm.slane %v969, 0
        %v978 = vperm.slane %v970, 0
        %v987 = vmul.f32 %v971, %v838
        %v988 = vmul.f32 %v972, %v838
        %v989 = vmul.f32 %v973, %v838
        %v990 = vmul.f32 %v974, %v838
        %v991 = vmul.f32 %v975, %v838
        %v992 = vmul.f32 %v976, %v838
        %v993 = vmul.f32 %v977, %v838
        %v994 = vmul.f32 %v978, %v838
        %v995 = vadd.f32 %v944, 1.0
        %v996 = vadd.f32 %v946, 1.0
        %v997 = vadd.f32 %v949, 1.0
        %v998 = vadd.f32 %v951, 1.0
        %v999 = vadd.f32 %v954, 1.0
        %v1000 = vadd.f32 %v956, 1.0
        %v1001 = vadd.f32 %v959, 1.0
        %v1002 = vadd.f32 %v961, 1.0
        %v1003 = vmul.f32 %v987, %v995
        %v1004 = vmul.f32 %v988, %v996
        %v1005 = vmul.f32 %v989, %v997
        %v1006 = vmul.f32 %v990, %v998
        %v1007 = vmul.f32 %v991, %v999
        %v1008 = vmul.f32 %v992, %v1000
        %v1009 = vmul.f32 %v993, %v1001
        %v1010 = vmul.f32 %v994, %v1002
        %v1011 = vmul.f32 %v1003, %v944
        %v1012 = vmul.f32 %v1004, %v946
        %v1013 = vmul.f32 %v1005, %v949
        %v1014 = vmul.f32 %v1006, %v951
        %v1015 = vmul.f32 %v1007, %v954
        %v1016 = vmul.f32 %v1008, %v956
        %v1017 = vmul.f32 %v1009, %v959
        %v1018 = vmul.f32 %v1010, %v961
        %v1019 = vpack.c.bf16 %v1012, %v1011
        %v1020 = vpack.c.bf16 %v1014, %v1013
        %v1021 = vpack.c.bf16 %v1016, %v1015
        %v1022 = vpack.c.bf16 %v1018, %v1017
        %v1023 = vld [vmem:[#allocation13] sm:$0xf]
        %v1024 = vld [vmem:[#allocation13 + $0x4] sm:$0xf]
        %v1025 = vld [vmem:[#allocation13 + $0x8] sm:$0xf]
        %v1026 = vld [vmem:[#allocation13 + $0xc] sm:$0xf]
        %v1027 = vld [vmem:[#allocation13 + $0x10] sm:$0xf]
        %v1028 = vld [vmem:[#allocation13 + $0x14] sm:$0xf]
        %v1029 = vld [vmem:[#allocation13 + $0x18] sm:$0xf]
        %v1030 = vld [vmem:[#allocation13 + $0x1c] sm:$0xf]
        %v1031 = vld [vmem:[#allocation13 + $0x20] sm:$0xf]
        %v1032 = vld [vmem:[#allocation13 + $0x24] sm:$0xf]
        %v1033 = vld [vmem:[#allocation13 + $0x28] sm:$0xf]
        %v1034 = vld [vmem:[#allocation13 + $0x2c] sm:$0xf]
        %v1035 = vld [vmem:[#allocation13 + $0x30] sm:$0xf]
        %v1036 = vld [vmem:[#allocation13 + $0x34] sm:$0xf]
        %v1037 = vld [vmem:[#allocation13 + $0x38] sm:$0xf]
        %v1038 = vld [vmem:[#allocation13 + $0x3c] sm:$0xf]
        %v1039 = vld [vmem:[%s10] sm:$0x1]
        %v1041 = vperm.slane %v1039, 0
        %v1059 = vunpack.c.l.b16 %v1023
        %v1060 = vunpack.c.l.b16 %v1024
        %v1061 = vunpack.c.l.b16 %v1025
        %v1062 = vunpack.c.l.b16 %v1026
        %v1063 = vunpack.c.l.b16 %v1027
        %v1064 = vunpack.c.l.b16 %v1028
        %v1065 = vunpack.c.l.b16 %v1029
        %v1066 = vunpack.c.l.b16 %v1030
        %v1067 = vunpack.c.l.b16 %v1031
        %v1068 = vunpack.c.l.b16 %v1032
        %v1069 = vunpack.c.l.b16 %v1033
        %v1070 = vunpack.c.l.b16 %v1034
        %v1071 = vunpack.c.l.b16 %v1035
        %v1072 = vunpack.c.l.b16 %v1036
        %v1073 = vunpack.c.l.b16 %v1037
        %v1074 = vunpack.c.l.b16 %v1038
        %v1075 = vpack.c.b16 %v1060, %v1059
        %v1076 = vpack.c.b16 %v1062, %v1061
        %v1077 = vpack.c.b16 %v1064, %v1063
        %v1078 = vpack.c.b16 %v1066, %v1065
        %v1079 = vpack.c.b16 %v1068, %v1067
        %v1080 = vpack.c.b16 %v1070, %v1069
        %v1081 = vpack.c.b16 %v1072, %v1071
        %v1082 = vpack.c.b16 %v1074, %v1073
        %1091 = vmatpush.bf16.msra.mxu0 %v1082
        %1092 = vmatpush.bf16.msra.mxu0 %v1081
        %1093 = vmatpush.bf16.msra.mxu0 %v1080
        %1094 = vmatpush.bf16.msra.mxu0 %v1079
        %1095 = vmatpush.bf16.msra.mxu0 %v1078
        %1096 = vmatpush.bf16.msra.mxu0 %v1077
        %1097 = vmatpush.bf16.msra.mxu0 %v1076
        %1098 = vmatpush.bf16.msra.mxu0 %v1075
        %1099 = vmatmul.bf16.gmra.mxu0 %v1019
        %v1100 = vpop.f32.mrf.mxu0
        %v1101 = vadd.f32 %v1041, %v1100
        %v1102 = vpop.f32.mrf.mxu0
        %v1103 = vadd.f32 %v1041, %v1102
        %1104 = vmatmul.bf16.gmra.mxu0 %v1020
        %v1105 = vpop.f32.mrf.mxu0
        %v1106 = vadd.f32 %v1041, %v1105
        %v1107 = vpop.f32.mrf.mxu0
        %v1108 = vadd.f32 %v1041, %v1107
        %1109 = vmatmul.bf16.gmra.mxu0 %v1021
        %v1110 = vpop.f32.mrf.mxu0
        %v1111 = vadd.f32 %v1041, %v1110
        %v1112 = vpop.f32.mrf.mxu0
        %v1113 = vadd.f32 %v1041, %v1112
        %1114 = vmatmul.bf16.gmra.mxu0 %v1022
        %v1115 = vpop.f32.mrf.mxu0
        %v1116 = vadd.f32 %v1041, %v1115
        %v1117 = vpop.f32.mrf.mxu0
        %v1118 = vadd.f32 %v1041, %v1117
        %1119 = vdwg.mxu0
        %v1120 = vpack.c.bf16 %v1101, %v1101
        %v1121 = vpack.c.bf16 %v1103, %v1103
        %v1122 = vpack.c.bf16 %v1106, %v1106
        %v1123 = vpack.c.bf16 %v1108, %v1108
        %v1124 = vpack.c.bf16 %v1111, %v1111
        %v1125 = vpack.c.bf16 %v1113, %v1113
        %v1126 = vpack.c.bf16 %v1116, %v1116
        %v1127 = vpack.c.bf16 %v1118, %v1118
        %1128 = vst [vmem:[%s680] sm:$0xf] %v1120
        %1129 = vst [vmem:[%s680 + $0x4] sm:$0xf] %v1121
        %1130 = vst [vmem:[%s680 + $0x8] sm:$0xf] %v1122
        %1131 = vst [vmem:[%s680 + $0xc] sm:$0xf] %v1123
        %1132 = vst [vmem:[%s680 + $0x10] sm:$0xf] %v1124
        %1133 = vst [vmem:[%s680 + $0x14] sm:$0xf] %v1125
        %1134 = vst [vmem:[%s680 + $0x18] sm:$0xf] %v1126
        %1135 = vst [vmem:[%s680 + $0x1c] sm:$0xf] %v1127
        %v1136 = vrot.slane %v1011, 4
        %v1137 = vmax.f32 %v1011, %v1136
        %v1138 = vrot.slane %v1137, 2
        %v1139 = vmax.f32 %v1137, %v1138
        %v1140 = vrot.slane %v1139, 1
        %v1141 = vmax.f32 %v1139, %v1140
        %v1142 = vrot.slane %v1012, 4
        %v1143 = vmax.f32 %v1012, %v1142
        %v1144 = vrot.slane %v1143, 2
        %v1145 = vmax.f32 %v1143, %v1144
        %v1146 = vrot.slane %v1145, 1
        %v1147 = vmax.f32 %v1145, %v1146
        %v1148 = vrot.slane %v1013, 4
        %v1149 = vmax.f32 %v1013, %v1148
        %v1150 = vrot.slane %v1149, 2
        %v1151 = vmax.f32 %v1149, %v1150
        %v1152 = vrot.slane %v1151, 1
        %v1153 = vmax.f32 %v1151, %v1152
        %v1154 = vrot.slane %v1014, 4
        %v1155 = vmax.f32 %v1014, %v1154
        %v1156 = vrot.slane %v1155, 2
        %v1157 = vmax.f32 %v1155, %v1156
        %v1158 = vrot.slane %v1157, 1
        %v1159 = vmax.f32 %v1157, %v1158
        %v1160 = vrot.slane %v1015, 4
        %v1161 = vmax.f32 %v1015, %v1160
        %v1162 = vrot.slane %v1161, 2
        %v1163 = vmax.f32 %v1161, %v1162
        %v1164 = vrot.slane %v1163, 1
        %v1165 = vmax.f32 %v1163, %v1164
        %v1166 = vrot.slane %v1016, 4
        %v1167 = vmax.f32 %v1016, %v1166
        %v1168 = vrot.slane %v1167, 2
        %v1169 = vmax.f32 %v1167, %v1168
        %v1170 = vrot.slane %v1169, 1
        %v1171 = vmax.f32 %v1169, %v1170
        %v1172 = vrot.slane %v1017, 4
        %v1173 = vmax.f32 %v1017, %v1172
        %v1174 = vrot.slane %v1173, 2
        %v1175 = vmax.f32 %v1173, %v1174
        %v1176 = vrot.slane %v1175, 1
        %v1177 = vmax.f32 %v1175, %v1176
        %v1178 = vrot.slane %v1018, 4
        %v1179 = vmax.f32 %v1018, %v1178
        %v1180 = vrot.slane %v1179, 2
        %v1181 = vmax.f32 %v1179, %v1180
        %v1182 = vrot.slane %v1181, 1
        %v1183 = vmax.f32 %v1181, %v1182
        %1192 = vrot.lane.b32.xlu0 %v1141, 96
        %v1193 = vpop.permute.xlu0 %1192
        %1194 = vrot.lane.b32.xlu0 %v1147, 96
        %v1195 = vpop.permute.xlu0 %1194
        %1196 = vrot.lane.b32.xlu0 %v1153, 96
        %v1197 = vpop.permute.xlu0 %1196
        %1198 = vrot.lane.b32.xlu0 %v1159, 96
        %v1199 = vpop.permute.xlu0 %1198
        %1200 = vrot.lane.b32.xlu0 %v1165, 96
        %v1201 = vpop.permute.xlu0 %1200
        %1202 = vrot.lane.b32.xlu0 %v1171, 96
        %v1203 = vpop.permute.xlu0 %1202
        %1204 = vrot.lane.b32.xlu0 %v1177, 96
        %v1205 = vpop.permute.xlu0 %1204
        %1206 = vrot.lane.b32.xlu0 %v1183, 96
        %v1207 = vpop.permute.xlu0 %1206
        %v1216 = vmax.f32 %v1141, %v1193
        %v1217 = vmax.f32 %v1147, %v1195
        %v1218 = vmax.f32 %v1153, %v1197
        %v1219 = vmax.f32 %v1159, %v1199
        %v1220 = vmax.f32 %v1165, %v1201
        %v1221 = vmax.f32 %v1171, %v1203
        %v1222 = vmax.f32 %v1177, %v1205
        %v1223 = vmax.f32 %v1183, %v1207
        %1224 = vrot.lane.b32.xlu0 %v1141, 64
        %v1225 = vpop.permute.xlu0 %1224
        %1226 = vrot.lane.b32.xlu0 %v1147, 64
        %v1227 = vpop.permute.xlu0 %1226
        %1228 = vrot.lane.b32.xlu0 %v1153, 64
        %v1229 = vpop.permute.xlu0 %1228
        %1230 = vrot.lane.b32.xlu0 %v1159, 64
        %v1231 = vpop.permute.xlu0 %1230
        %1232 = vrot.lane.b32.xlu0 %v1165, 64
        %v1233 = vpop.permute.xlu0 %1232
        %1234 = vrot.lane.b32.xlu0 %v1171, 64
        %v1235 = vpop.permute.xlu0 %1234
        %1236 = vrot.lane.b32.xlu0 %v1177, 64
        %v1237 = vpop.permute.xlu0 %1236
        %1238 = vrot.lane.b32.xlu0 %v1183, 64
        %v1239 = vpop.permute.xlu0 %1238
        %v1248 = vmax.f32 %v1216, %v1225
        %v1249 = vmax.f32 %v1217, %v1227
        %v1250 = vmax.f32 %v1218, %v1229
        %v1251 = vmax.f32 %v1219, %v1231
        %v1252 = vmax.f32 %v1220, %v1233
        %v1253 = vmax.f32 %v1221, %v1235
        %v1254 = vmax.f32 %v1222, %v1237
        %v1255 = vmax.f32 %v1223, %v1239
        %1256 = vrot.lane.b32.xlu0 %v1141, 32
        %v1257 = vpop.permute.xlu0 %1256
        %1258 = vrot.lane.b32.xlu0 %v1147, 32
        %v1259 = vpop.permute.xlu0 %1258
        %1260 = vrot.lane.b32.xlu0 %v1153, 32
        %v1261 = vpop.permute.xlu0 %1260
        %1262 = vrot.lane.b32.xlu0 %v1159, 32
        %v1263 = vpop.permute.xlu0 %1262
        %1264 = vrot.lane.b32.xlu0 %v1165, 32
        %v1265 = vpop.permute.xlu0 %1264
        %1266 = vrot.lane.b32.xlu0 %v1171, 32
        %v1267 = vpop.permute.xlu0 %1266
        %1268 = vrot.lane.b32.xlu0 %v1177, 32
        %v1269 = vpop.permute.xlu0 %1268
        %1270 = vrot.lane.b32.xlu0 %v1183, 32
        %v1271 = vpop.permute.xlu0 %1270
        %v1280 = vmax.f32 %v1248, %v1257
        %v1281 = vmax.f32 %v1249, %v1259
        %v1282 = vmax.f32 %v1250, %v1261
        %v1283 = vmax.f32 %v1251, %v1263
        %v1284 = vmax.f32 %v1252, %v1265
        %v1285 = vmax.f32 %v1253, %v1267
        %v1286 = vmax.f32 %v1254, %v1269
        %v1287 = vmax.f32 %v1255, %v1271
        %v1296 = vrot.slane %v1281, 7
        %vm1297 = vcmask 1041409
        %v1298 = vsel %vm1297, %v1296, %v1280
        %v1299 = vrot.slane %v1282, 6
        %vm1300 = vcmask 1042434
        %v1301 = vsel %vm1300, %v1299, %v1298
        %v1302 = vrot.slane %v1283, 5
        %vm1303 = vcmask 1043459
        %v1304 = vsel %vm1303, %v1302, %v1301
        %v1305 = vrot.slane %v1284, 4
        %vm1306 = vcmask 1044484
        %v1307 = vsel %vm1306, %v1305, %v1304
        %v1308 = vrot.slane %v1285, 3
        %vm1309 = vcmask 1045509
        %v1310 = vsel %vm1309, %v1308, %v1307
        %v1311 = vrot.slane %v1286, 2
        %vm1312 = vcmask 1046534
        %v1313 = vsel %vm1312, %v1311, %v1310
        %v1314 = vrot.slane %v1287, 1
        %vm1315 = vcmask 1047559
        %v1316 = vsel %vm1315, %v1314, %v1313
        %1318 = vrot.lane.b32.xlu0 %v1316, 32
        %v1319 = vpop.permute.xlu0 %1318
        %1321 = vrot.lane.b32.xlu0 %v1316, 64
        %v1322 = vpop.permute.xlu0 %1321
        %1324 = vrot.lane.b32.xlu0 %v1316, 96
        %v1325 = vpop.permute.xlu0 %1324
        %v1327 = vsel %vm706, %v1316, %v1319
        %vm1328 = vcmask 523264
        %v1329 = vsel %vm1328, %v1327, %v1322
        %vm1330 = vcmask 785408
        %v1331 = vsel %vm1330, %v1329, %v1325
        %v1333 = vrot.slane %v1331, 1
        %v1334 = vrot.slane %v1331, 2
        %v1335 = vrot.slane %v1331, 3
        %v1336 = vrot.slane %v1331, 4
        %v1337 = vrot.slane %v1331, 5
        %v1338 = vrot.slane %v1331, 6
        %v1339 = vrot.slane %v1331, 7
        %v1340 = vperm.slane %v1331, 0
        %v1341 = vperm.slane %v1333, 0
        %v1342 = vperm.slane %v1334, 0
        %v1343 = vperm.slane %v1335, 0
        %v1344 = vperm.slane %v1336, 0
        %v1345 = vperm.slane %v1337, 0
        %v1346 = vperm.slane %v1338, 0
        %v1347 = vperm.slane %v1339, 0
        %v1356 = vsub.f32 %v1011, %v1340
        %v1357 = vsub.f32 %v1012, %v1341
        %v1358 = vsub.f32 %v1013, %v1342
        %v1359 = vsub.f32 %v1014, %v1343
        %v1360 = vsub.f32 %v1015, %v1344
        %v1361 = vsub.f32 %v1016, %v1345
        %v1362 = vsub.f32 %v1017, %v1346
        %v1363 = vsub.f32 %v1018, %v1347
        %v1364 = vmul.f32 %v1356, 1.442695
        %v1365 = vpow.pop %v1364
        %v1366 = vmul.f32 %v1357, 1.442695
        %v1367 = vpow.pop %v1366
        %v1368 = vmul.f32 %v1358, 1.442695
        %v1369 = vpow.pop %v1368
        %v1370 = vmul.f32 %v1359, 1.442695
        %v1371 = vpow.pop %v1370
        %v1372 = vmul.f32 %v1360, 1.442695
        %v1373 = vpow.pop %v1372
        %v1374 = vmul.f32 %v1361, 1.442695
        %v1375 = vpow.pop %v1374
        %v1376 = vmul.f32 %v1362, 1.442695
        %v1377 = vpow.pop %v1376
        %v1378 = vmul.f32 %v1363, 1.442695
        %v1379 = vpow.pop %v1378
        %v1380 = vrot.slane %v1365, 4
        %v1381 = vadd.f32 %v1365, %v1380
        %v1382 = vrot.slane %v1381, 2
        %v1383 = vadd.f32 %v1381, %v1382
        %v1384 = vrot.slane %v1383, 1
        %v1385 = vadd.f32 %v1383, %v1384
        %v1386 = vrot.slane %v1367, 4
        %v1387 = vadd.f32 %v1367, %v1386
        %v1388 = vrot.slane %v1387, 2
        %v1389 = vadd.f32 %v1387, %v1388
        %v1390 = vrot.slane %v1389, 1
        %v1391 = vadd.f32 %v1389, %v1390
        %v1392 = vrot.slane %v1369, 4
        %v1393 = vadd.f32 %v1369, %v1392
        %v1394 = vrot.slane %v1393, 2
        %v1395 = vadd.f32 %v1393, %v1394
        %v1396 = vrot.slane %v1395, 1
        %v1397 = vadd.f32 %v1395, %v1396
        %v1398 = vrot.slane %v1371, 4
        %v1399 = vadd.f32 %v1371, %v1398
        %v1400 = vrot.slane %v1399, 2
        %v1401 = vadd.f32 %v1399, %v1400
        %v1402 = vrot.slane %v1401, 1
        %v1403 = vadd.f32 %v1401, %v1402
        %v1404 = vrot.slane %v1373, 4
        %v1405 = vadd.f32 %v1373, %v1404
        %v1406 = vrot.slane %v1405, 2
        %v1407 = vadd.f32 %v1405, %v1406
        %v1408 = vrot.slane %v1407, 1
        %v1409 = vadd.f32 %v1407, %v1408
        %v1410 = vrot.slane %v1375, 4
        %v1411 = vadd.f32 %v1375, %v1410
        %v1412 = vrot.slane %v1411, 2
        %v1413 = vadd.f32 %v1411, %v1412
        %v1414 = vrot.slane %v1413, 1
        %v1415 = vadd.f32 %v1413, %v1414
        %v1416 = vrot.slane %v1377, 4
        %v1417 = vadd.f32 %v1377, %v1416
        %v1418 = vrot.slane %v1417, 2
        %v1419 = vadd.f32 %v1417, %v1418
        %v1420 = vrot.slane %v1419, 1
        %v1421 = vadd.f32 %v1419, %v1420
        %v1422 = vrot.slane %v1379, 4
        %v1423 = vadd.f32 %v1379, %v1422
        %v1424 = vrot.slane %v1423, 2
        %v1425 = vadd.f32 %v1423, %v1424
        %v1426 = vrot.slane %v1425, 1
        %v1427 = vadd.f32 %v1425, %v1426
        %v1428 = vmul.f32 %v1365, %v851
        %v1429 = vmul.f32 %v1367, %v851
        %v1430 = vmul.f32 %v1369, %v851
        %v1431 = vmul.f32 %v1371, %v851
        %v1432 = vmul.f32 %v1373, %v851
        %v1433 = vmul.f32 %v1375, %v851
        %v1434 = vmul.f32 %v1377, %v851
        %v1435 = vmul.f32 %v1379, %v851
        %v1436 = vrot.slane %v1428, 4
        %v1437 = vadd.f32 %v1428, %v1436
        %v1438 = vrot.slane %v1437, 2
        %v1439 = vadd.f32 %v1437, %v1438
        %v1440 = vrot.slane %v1439, 1
        %v1441 = vadd.f32 %v1439, %v1440
        %v1442 = vrot.slane %v1429, 4
        %v1443 = vadd.f32 %v1429, %v1442
        %v1444 = vrot.slane %v1443, 2
        %v1445 = vadd.f32 %v1443, %v1444
        %v1446 = vrot.slane %v1445, 1
        %v1447 = vadd.f32 %v1445, %v1446
        %v1448 = vrot.slane %v1430, 4
        %v1449 = vadd.f32 %v1430, %v1448
        %v1450 = vrot.slane %v1449, 2
        %v1451 = vadd.f32 %v1449, %v1450
        %v1452 = vrot.slane %v1451, 1
        %v1453 = vadd.f32 %v1451, %v1452
        %v1454 = vrot.slane %v1431, 4
        %v1455 = vadd.f32 %v1431, %v1454
        %v1456 = vrot.slane %v1455, 2
        %v1457 = vadd.f32 %v1455, %v1456
        %v1458 = vrot.slane %v1457, 1
        %v1459 = vadd.f32 %v1457, %v1458
        %v1460 = vrot.slane %v1432, 4
        %v1461 = vadd.f32 %v1432, %v1460
        %v1462 = vrot.slane %v1461, 2
        %v1463 = vadd.f32 %v1461, %v1462
        %v1464 = vrot.slane %v1463, 1
        %v1465 = vadd.f32 %v1463, %v1464
        %v1466 = vrot.slane %v1433, 4
        %v1467 = vadd.f32 %v1433, %v1466
        %v1468 = vrot.slane %v1467, 2
        %v1469 = vadd.f32 %v1467, %v1468
        %v1470 = vrot.slane %v1469, 1
        %v1471 = vadd.f32 %v1469, %v1470
        %v1472 = vrot.slane %v1434, 4
        %v1473 = vadd.f32 %v1434, %v1472
        %v1474 = vrot.slane %v1473, 2
        %v1475 = vadd.f32 %v1473, %v1474
        %v1476 = vrot.slane %v1475, 1
        %v1477 = vadd.f32 %v1475, %v1476
        %v1478 = vrot.slane %v1435, 4
        %v1479 = vadd.f32 %v1435, %v1478
        %v1480 = vrot.slane %v1479, 2
        %v1481 = vadd.f32 %v1479, %v1480
        %v1482 = vrot.slane %v1481, 1
        %v1483 = vadd.f32 %v1481, %v1482
        %1492 = vrot.lane.b32.xlu0 %v1385, 96
        %v1493 = vpop.permute.xlu0 %1492
        %1494 = vrot.lane.b32.xlu0 %v1391, 96
        %v1495 = vpop.permute.xlu0 %1494
        %1496 = vrot.lane.b32.xlu0 %v1397, 96
        %v1497 = vpop.permute.xlu0 %1496
        %1498 = vrot.lane.b32.xlu0 %v1403, 96
        %v1499 = vpop.permute.xlu0 %1498
        %1500 = vrot.lane.b32.xlu0 %v1409, 96
        %v1501 = vpop.permute.xlu0 %1500
        %1502 = vrot.lane.b32.xlu0 %v1415, 96
        %v1503 = vpop.permute.xlu0 %1502
        %1504 = vrot.lane.b32.xlu0 %v1421, 96
        %v1505 = vpop.permute.xlu0 %1504
        %1506 = vrot.lane.b32.xlu0 %v1427, 96
        %v1507 = vpop.permute.xlu0 %1506
        %v1516 = vadd.f32 %v1385, %v1493
        %v1517 = vadd.f32 %v1391, %v1495
        %v1518 = vadd.f32 %v1397, %v1497
        %v1519 = vadd.f32 %v1403, %v1499
        %v1520 = vadd.f32 %v1409, %v1501
        %v1521 = vadd.f32 %v1415, %v1503
        %v1522 = vadd.f32 %v1421, %v1505
        %v1523 = vadd.f32 %v1427, %v1507
        %1532 = vrot.lane.b32.xlu0 %v1441, 96
        %v1533 = vpop.permute.xlu0 %1532
        %1534 = vrot.lane.b32.xlu0 %v1447, 96
        %v1535 = vpop.permute.xlu0 %1534
        %1536 = vrot.lane.b32.xlu0 %v1453, 96
        %v1537 = vpop.permute.xlu0 %1536
        %1538 = vrot.lane.b32.xlu0 %v1459, 96
        %v1539 = vpop.permute.xlu0 %1538
        %1540 = vrot.lane.b32.xlu0 %v1465, 96
        %v1541 = vpop.permute.xlu0 %1540
        %1542 = vrot.lane.b32.xlu0 %v1471, 96
        %v1543 = vpop.permute.xlu0 %1542
        %1544 = vrot.lane.b32.xlu0 %v1477, 96
        %v1545 = vpop.permute.xlu0 %1544
        %1546 = vrot.lane.b32.xlu0 %v1483, 96
        %v1547 = vpop.permute.xlu0 %1546
        %v1556 = vadd.f32 %v1441, %v1533
        %v1557 = vadd.f32 %v1447, %v1535
        %v1558 = vadd.f32 %v1453, %v1537
        %v1559 = vadd.f32 %v1459, %v1539
        %v1560 = vadd.f32 %v1465, %v1541
        %v1561 = vadd.f32 %v1471, %v1543
        %v1562 = vadd.f32 %v1477, %v1545
        %v1563 = vadd.f32 %v1483, %v1547
        %1564 = vrot.lane.b32.xlu0 %v1385, 64
        %v1565 = vpop.permute.xlu0 %1564
        %1566 = vrot.lane.b32.xlu0 %v1391, 64
        %v1567 = vpop.permute.xlu0 %1566
        %1568 = vrot.lane.b32.xlu0 %v1397, 64
        %v1569 = vpop.permute.xlu0 %1568
        %1570 = vrot.lane.b32.xlu0 %v1403, 64
        %v1571 = vpop.permute.xlu0 %1570
        %1572 = vrot.lane.b32.xlu0 %v1409, 64
        %v1573 = vpop.permute.xlu0 %1572
        %1574 = vrot.lane.b32.xlu0 %v1415, 64
        %v1575 = vpop.permute.xlu0 %1574
        %1576 = vrot.lane.b32.xlu0 %v1421, 64
        %v1577 = vpop.permute.xlu0 %1576
        %1578 = vrot.lane.b32.xlu0 %v1427, 64
        %v1579 = vpop.permute.xlu0 %1578
        %v1588 = vadd.f32 %v1516, %v1565
        %v1589 = vadd.f32 %v1517, %v1567
        %v1590 = vadd.f32 %v1518, %v1569
        %v1591 = vadd.f32 %v1519, %v1571
        %v1592 = vadd.f32 %v1520, %v1573
        %v1593 = vadd.f32 %v1521, %v1575
        %v1594 = vadd.f32 %v1522, %v1577
        %v1595 = vadd.f32 %v1523, %v1579
        %1596 = vrot.lane.b32.xlu0 %v1441, 64
        %v1597 = vpop.permute.xlu0 %1596
        %1598 = vrot.lane.b32.xlu0 %v1447, 64
        %v1599 = vpop.permute.xlu0 %1598
        %1600 = vrot.lane.b32.xlu0 %v1453, 64
        %v1601 = vpop.permute.xlu0 %1600
        %1602 = vrot.lane.b32.xlu0 %v1459, 64
        %v1603 = vpop.permute.xlu0 %1602
        %1604 = vrot.lane.b32.xlu0 %v1465, 64
        %v1605 = vpop.permute.xlu0 %1604
        %1606 = vrot.lane.b32.xlu0 %v1471, 64
        %v1607 = vpop.permute.xlu0 %1606
        %1608 = vrot.lane.b32.xlu0 %v1477, 64
        %v1609 = vpop.permute.xlu0 %1608
        %1610 = vrot.lane.b32.xlu0 %v1483, 64
        %v1611 = vpop.permute.xlu0 %1610
        %v1620 = vadd.f32 %v1556, %v1597
        %v1621 = vadd.f32 %v1557, %v1599
        %v1622 = vadd.f32 %v1558, %v1601
        %v1623 = vadd.f32 %v1559, %v1603
        %v1624 = vadd.f32 %v1560, %v1605
        %v1625 = vadd.f32 %v1561, %v1607
        %v1626 = vadd.f32 %v1562, %v1609
        %v1627 = vadd.f32 %v1563, %v1611
        %1628 = vrot.lane.b32.xlu0 %v1385, 32
        %v1629 = vpop.permute.xlu0 %1628
        %1630 = vrot.lane.b32.xlu0 %v1391, 32
        %v1631 = vpop.permute.xlu0 %1630
        %1632 = vrot.lane.b32.xlu0 %v1397, 32
        %v1633 = vpop.permute.xlu0 %1632
        %1634 = vrot.lane.b32.xlu0 %v1403, 32
        %v1635 = vpop.permute.xlu0 %1634
        %1636 = vrot.lane.b32.xlu0 %v1409, 32
        %v1637 = vpop.permute.xlu0 %1636
        %1638 = vrot.lane.b32.xlu0 %v1415, 32
        %v1639 = vpop.permute.xlu0 %1638
        %1640 = vrot.lane.b32.xlu0 %v1421, 32
        %v1641 = vpop.permute.xlu0 %1640
        %1642 = vrot.lane.b32.xlu0 %v1427, 32
        %v1643 = vpop.permute.xlu0 %1642
        %v1652 = vadd.f32 %v1588, %v1629
        %v1653 = vadd.f32 %v1589, %v1631
        %v1654 = vadd.f32 %v1590, %v1633
        %v1655 = vadd.f32 %v1591, %v1635
        %v1656 = vadd.f32 %v1592, %v1637
        %v1657 = vadd.f32 %v1593, %v1639
        %v1658 = vadd.f32 %v1594, %v1641
        %v1659 = vadd.f32 %v1595, %v1643
        %1660 = vrot.lane.b32.xlu0 %v1441, 32
        %v1661 = vpop.permute.xlu0 %1660
        %1662 = vrot.lane.b32.xlu0 %v1447, 32
        %v1663 = vpop.permute.xlu0 %1662
        %1664 = vrot.lane.b32.xlu0 %v1453, 32
        %v1665 = vpop.permute.xlu0 %1664
        %1666 = vrot.lane.b32.xlu0 %v1459, 32
        %v1667 = vpop.permute.xlu0 %1666
        %1668 = vrot.lane.b32.xlu0 %v1465, 32
        %v1669 = vpop.permute.xlu0 %1668
        %1670 = vrot.lane.b32.xlu0 %v1471, 32
        %v1671 = vpop.permute.xlu0 %1670
        %1672 = vrot.lane.b32.xlu0 %v1477, 32
        %v1673 = vpop.permute.xlu0 %1672
        %1674 = vrot.lane.b32.xlu0 %v1483, 32
        %v1675 = vpop.permute.xlu0 %1674
        %v1684 = vadd.f32 %v1620, %v1661
        %v1685 = vadd.f32 %v1621, %v1663
        %v1686 = vadd.f32 %v1622, %v1665
        %v1687 = vadd.f32 %v1623, %v1667
        %v1688 = vadd.f32 %v1624, %v1669
        %v1689 = vadd.f32 %v1625, %v1671
        %v1690 = vadd.f32 %v1626, %v1673
        %v1691 = vadd.f32 %v1627, %v1675
        %v1692 = vrcp.pop %v1652
        %v1693 = vrcp.pop %v1653
        %v1694 = vrcp.pop %v1654
        %v1695 = vrcp.pop %v1655
        %v1696 = vrcp.pop %v1656
        %v1697 = vrcp.pop %v1657
        %v1698 = vrcp.pop %v1658
        %v1699 = vrcp.pop %v1659
        %v1700 = vmul.f32 %v1684, %v1692
        %v1701 = vmul.f32 %v1685, %v1693
        %v1702 = vmul.f32 %v1686, %v1694
        %v1703 = vmul.f32 %v1687, %v1695
        %v1704 = vmul.f32 %v1688, %v1696
        %v1705 = vmul.f32 %v1689, %v1697
        %v1706 = vmul.f32 %v1690, %v1698
        %v1707 = vmul.f32 %v1691, %v1699
        %v1708 = vpack.c.bf16 %v1700, %v1700
        %v1709 = vpack.c.bf16 %v1701, %v1701
        %v1710 = vpack.c.bf16 %v1702, %v1702
        %v1711 = vpack.c.bf16 %v1703, %v1703
        %v1712 = vpack.c.bf16 %v1704, %v1704
        %v1713 = vpack.c.bf16 %v1705, %v1705
        %v1714 = vpack.c.bf16 %v1706, %v1706
        %v1715 = vpack.c.bf16 %v1707, %v1707
        %v1716 = vld [vmem:[#allocation14] sm:$0xf]
        %v1717 = vld [vmem:[#allocation14 + $0x4] sm:$0xf]
        %v1718 = vld [vmem:[#allocation14 + $0x8] sm:$0xf]
        %v1719 = vld [vmem:[#allocation14 + $0xc] sm:$0xf]
        %v1720 = vld [vmem:[%s12] sm:$0x1]
        %v1722 = vperm.slane %v1720, 0
        %v1732 = vunpack.c.l.b16 %v1708
        %v1733 = vunpack.c.l.b16 %v1709
        %v1734 = vunpack.c.l.b16 %v1710
        %v1735 = vunpack.c.l.b16 %v1711
        %v1736 = vunpack.c.l.b16 %v1712
        %v1737 = vunpack.c.l.b16 %v1713
        %v1738 = vunpack.c.l.b16 %v1714
        %v1739 = vunpack.c.l.b16 %v1715
        %v1740 = vrot.slane %v1733, 7
        %v1741 = vsel %vm1297, %v1740, %v1732
        %v1742 = vrot.slane %v1734, 6
        %v1743 = vsel %vm1300, %v1742, %v1741
        %v1744 = vrot.slane %v1735, 5
        %v1745 = vsel %vm1303, %v1744, %v1743
        %v1746 = vrot.slane %v1736, 4
        %v1747 = vsel %vm1306, %v1746, %v1745
        %v1748 = vrot.slane %v1737, 3
        %v1749 = vsel %vm1309, %v1748, %v1747
        %v1750 = vrot.slane %v1738, 2
        %v1751 = vsel %vm1312, %v1750, %v1749
        %v1752 = vrot.slane %v1739, 1
        %v1753 = vsel %vm1315, %v1752, %v1751
        %v1754 = vpack.c.b16 %v1753, %v1753
        %v1759 = vunpack.c.l.b16 %v1716
        %v1760 = vunpack.c.l.b16 %v1717
        %v1761 = vunpack.c.l.b16 %v1718
        %v1762 = vunpack.c.l.b16 %v1719
        %v1763 = vpack.c.b16 %v1760, %v1759
        %v1764 = vpack.c.b16 %v1762, %v1761
        %v1768 = vsel %vm706, %v1754, 0
        %1770 = vmatpush.bf16.msra.mxu0 0
        %1771 = vmatpush.bf16.msra.mxu0 0
        %1772 = vmatpush.bf16.msra.mxu0 0
        %1773 = vmatpush.bf16.msra.mxu0 0
        %1774 = vmatpush.bf16.msra.mxu0 0
        %1775 = vmatpush.bf16.msra.mxu0 0
        %1776 = vmatpush.bf16.msra.mxu0 %v1764
        %1777 = vmatpush.bf16.msra.mxu0 %v1763
        %1778 = vmatmul.bf16.gmra.mxu0 %v1768
        %v1779 = vpop.f32.mrf.mxu0
        %v1780 = vadd.f32 %v1722, %v1779
        %v1781 = vpop.f32.mrf.mxu0
        %1782 = vdwg.mxu0
        %1783 = vst.msk [vmem:[%s673] sm:$0xff] %vm706, %v1780
        %s1784 = sand.u32 %s355, 1
        %s1785 = scalar_lea.sflag [#allocation4], %s1784
        %s1786 = sand.u32 %s355, 1
        %s1787 = smul.addr %s1786, 8
        %s1788 = scalar_lea.vmem [#allocation16], %s1787
        %s1789 = sand.u32 %s383, 1
        %s1790 = scalar_lea.sflag [#allocation18], %s1789
        %s1791 = sand.u32 %s383, 1
        %s1792 = smul.addr %s1791, 32
        %s1793 = scalar_lea.vmem [#allocation17], %s1792
        // Predicated region
        $region105: #{tpu_custom_call.1} parent=71 // pred_check
          %p1794 = pneg %p365
        $region106: #{tpu_custom_call.1} parent=71 // pred_check_branch
          %1796 = sbr.rel (%p1794) target = $region108
        $region107: #{tpu_custom_call.1} parent=71 // pred_region
          %1798 = vsyncadd %s1785, 0
          %s1799 = smul.addr %s45, 4
          %s1800 = sadd.s32 %s46, %s1799
          %s1801 = smul.addr %s1800, 8
          %s1802 = scalar_lea.hbm %s13, %s1801
          %s1804 = sshll.u32 %s1788, 4
          %s1805 = int_to_ptr.vmem [resolvable:$true] %s1804
          %s1806 = sshll.u32 %s1802, 4
          %s1807 = int_to_ptr.hbm [resolvable:$true] %s1806
          %1809 = dma.vmem_to_hbm [thread:$0]  %s1805, 128, %s1807, %s1785
        $region108: #{tpu_custom_call.1} parent=71 // pred_fallthru
          _
        // Predicated region
        $region109: #{tpu_custom_call.1} parent=71 // pred_check
          %p1810 = pneg %p393
        $region110: #{tpu_custom_call.1} parent=71 // pred_check_branch
          %1812 = sbr.rel (%p1810) target = $region112
        $region111: #{tpu_custom_call.1} parent=71 // pred_region
          %s1813 = smul.u32 8, %s46
          %1815 = vsyncadd %s1790, 0
          %s1816 = smul.addr %s45, 32
          %s1817 = sadd.s32 %s1813, %s1816
          %s1818 = smul.addr %s1817, 4
          %s1819 = scalar_lea.hbm %s14, %s1818
          %s1820 = sshll.u32 %s1793, 4
          %s1821 = int_to_ptr.vmem [resolvable:$true] %s1820
          %s1822 = sshll.u32 %s1819, 4
          %s1823 = int_to_ptr.hbm [resolvable:$true] %s1822
          %1828 = dma.vmem_to_hbm [thread:$0]  %s1821, 512, %s1823, %s1790, 64, 64, 4
        $region112: #{tpu_custom_call.1} parent=71 // pred_fallthru
          _
      $region72: #{tpu_custom_call.1} parent=5 // pred_fallthru
        _
      %p1829 = scmp.le.s32.totalorder 2, %s36
      // Predicated region
      $region113: #{tpu_custom_call.1} parent=5 // pred_check
        %p1830 = pneg %p1829
      $region114: #{tpu_custom_call.1} parent=5 // pred_check_branch
        %1832 = sbr.rel (%p1830) target = $region116
      $region115: #{tpu_custom_call.1} parent=5 // pred_region
        %s1833 = ssub.s32 %s36, 2
        // Predicated region
        $region117: #{tpu_custom_call.1} parent=115 // pred_check
          %p1834 = pneg %p371
        $region118: #{tpu_custom_call.1} parent=115 // pred_check_branch
          %1836 = sbr.rel (%p1834) target = $region120
        $region119: #{tpu_custom_call.1} parent=115 // pred_region
          %s1837 = sand.u32 %s356, 1
          %s1838 = scalar_lea.sflag [#allocation4], %s1837
          %s1839 = sand.u32 %s356, 1
          %s1840 = smul.addr %s1839, 8
          %s1841 = scalar_lea.vmem [#allocation16], %s1840
          %1843 = dma.done %s1838, 128
        $region120: #{tpu_custom_call.1} parent=115 // pred_fallthru
          _
        // Predicated region
        $region121: #{tpu_custom_call.1} parent=115 // pred_check
          %p1844 = pneg %p399
        $region122: #{tpu_custom_call.1} parent=115 // pred_check_branch
          %1846 = sbr.rel (%p1844) target = $region124
        $region123: #{tpu_custom_call.1} parent=115 // pred_region
          %s1847 = sand.u32 %s384, 1
          %s1848 = scalar_lea.sflag [#allocation18], %s1847
          %s1849 = sand.u32 %s384, 1
          %s1850 = smul.addr %s1849, 32
          %s1851 = scalar_lea.vmem [#allocation17], %s1850
          %1853 = dma.done %s1848, 512
        $region124: #{tpu_custom_call.1} parent=115 // pred_fallthru
          _
      $region116: #{tpu_custom_call.1} parent=5 // pred_fallthru
        _
    $region6: #{tpu_custom_call.1} parent=1 // loop_footer
      %s40 = sadd.s32 1, %s36
    $region7: #{tpu_custom_call.1} parent=1 // loop_footer_branch
      %35 = sbr.rel target = $region3
    $region8: #{tpu_custom_call.1} parent=1 // loop_exit
      _
    %1854 = vsyncpa [#allocation3], 1
    %s1855 = scalar_lea.sflag [#allocation3], 1
    %1856 = vsyncpa %s1855, 1
    %1857 = vsyncpa [#allocation6], 1
    %s1858 = scalar_lea.sflag [#allocation6], 1
    %1859 = vsyncpa %s1858, 1
    %1860 = vsyncpa [#allocation9], 1
    %1861 = vsyncpa [#allocation12], 1
    %1862 = vsyncpa [#allocation15], 1
    %1863 = vsyncpa [#allocation4], 1
    %s1864 = scalar_lea.sflag [#allocation4], 1
    %1865 = vsyncpa %s1864, 1
    %1866 = vsyncpa [#allocation18], 1
    %s1867 = scalar_lea.sflag [#allocation18], 1
    %1868 = vsyncpa %s1867, 1

</llo_original>
